<compile_context>
chip_gen: v7x
topology: tpu7x:2x2x1
jax: 0.10.0
libtpu: 0.0.40
codegen_flags: <defaults>
</compile_context>

<pallas_src>
import math

import numpy as np

import jax
import jax.numpy as jnp
from jax.experimental import pallas as pl
from jax.experimental.pallas import tpu as pltpu

# ----------------------------- configuration --------------------------------
M = 8            # batch size
D = 8            # feature dim (must be even for the coupling split)
DH = D // 2      # half dim
H = 32           # hidden width of each coupling MLP
H2 = 2 * H       # fused (s|t) hidden width
K = 4            # number of AffineHalfFlow layers
NEG_SLOPE = 0.2  # nflib MLP uses LeakyReLU(0.2)
LOG_2PI = math.log(2.0 * math.pi)

# fused parameter slab layout (per layer, rows x 64 lanes)
RP = D + 2 * H2 + 8          # 8 (w1) + 64 (w2) + 64 (w3) + 8 (biases) = 144 rows
B_ROW = D + 2 * H2           # first bias row within a layer block (=136)

# packed output layout: one (M, 128) f32 slab
OUT_LANES = 128
N_USED = (K + 1) * D + 2     # 5 zs stages * 8 lanes + logprob + logdet = 42


def _leaky_relu(x):
    return jnp.where(x >= 0, x, NEG_SLOPE * x)


# ---------------- slot-space bookkeeping (host side, static) -----------------
def _slot_bookkeeping():
    """Track where each original feature ("slot") sits after every layer's
    split/concat permutation, plus which slots feed the MLP / get transformed."""
    even = np.arange(0, D, 2)
    odd = np.arange(1, D, 2)
    pos2slot = [np.arange(D)]          # pos2slot[k][p] = slot at column p of x_k
    input_slots, trans_slots = [], []
    p2s = np.arange(D)
    for k in range(K):
        if k % 2 == 0:                 # parity 0: even cols -> MLP, odd cols transformed
            input_slots.append(p2s[even].copy())
            trans_slots.append(p2s[odd].copy())
        else:                          # parity 1: odd cols -> MLP, even cols transformed
            input_slots.append(p2s[odd].copy())
            trans_slots.append(p2s[even].copy())
        p2s = np.concatenate([p2s[even], p2s[odd]])   # concat([z0, z1], dim=1)
        pos2slot.append(p2s.copy())
    return pos2slot, input_slots, trans_slots


_POS2SLOT, _INPUT_SLOTS, _TRANS_SLOTS = _slot_bookkeeping()


# ------------------------------ kernel body ----------------------------------
def nf_kernel(x_ref, p_ref, out_ref):
    y = x_ref[...]                                   # (M, D) state in slot space
    pieces = [y]                                     # zs[0] = input, like the PyTorch list
    logdet = jnp.zeros((M, 1), jnp.float32)

    for k in range(K):                               # K is small -> fully unrolled
        base = k * RP
        w1 = p_ref[base:base + D, :]                 # (D, H2)   selection folded in
        w2 = p_ref[base + D:base + D + H2, :]        # (H2, H2)  block-diag (s | t)
        w3 = p_ref[base + D + H2:base + B_ROW, :]    # (H2, H2)  only lanes [0, 2D) non-zero
        b1 = p_ref[base + B_ROW:base + B_ROW + 1, :]         # (1, H2)
        b2 = p_ref[base + B_ROW + 1:base + B_ROW + 2, :]     # (1, H2)
        b3 = p_ref[base + B_ROW + 2:base + B_ROW + 3, :]     # (1, H2)

        # First (D -> H2) layer on the VPU: 8 broadcast MACs with a tree sum.
        # Keeps one MXU fill/drain round-trip per layer off the serial chain.
        terms = [y[:, d:d + 1] * w1[d:d + 1, :] for d in range(D)]
        while len(terms) > 1:
            terms = [terms[i] + terms[i + 1] for i in range(0, len(terms), 2)]
        h = _leaky_relu(terms[0] + b1)               # (M, H2)

        # Remaining two 64-wide contractions stay on the MXU.
        h = _leaky_relu(jnp.dot(h, w2, preferred_element_type=jnp.float32) + b2)
        st = jnp.dot(h, w3, preferred_element_type=jnp.float32) + b3   # (M, H2)

        s = st[:, :D]                                # s_full: 0 at identity slots
        t = st[:, D:2 * D]                           # t_full: 0 at identity slots

        y = jnp.exp(s) * y + t                       # in-place coupling update (slot space)
        logdet = logdet + jnp.sum(s, axis=1, keepdims=True)
        pieces.append(y)

    # prior.log_prob(zs[-1]).view(m, -1).sum(1) with prior = N(0, I_D).
    # (sum of squares is permutation invariant, so slot space is fine.)
    logprob = -0.5 * jnp.sum(y * y, axis=1, keepdims=True) - 0.5 * D * LOG_2PI
    pieces.append(logprob)
    pieces.append(logdet)
    pieces.append(jnp.zeros((M, OUT_LANES - N_USED), jnp.float32))

    # single lane-dense (M, 128) store: zs in lanes [0, (K+1)*D), stats next.
    out_ref[...] = jnp.concatenate(pieces, axis=1)


# ------------------------------ host helpers ---------------------------------
def init_params(key):
    """Raw per-flow coupling-MLP parameters (same layout/init as nflib), stacked over K."""
    keys = jax.random.split(key, 12)

    def u(k, shape, fan_in):
        bound = 1.0 / math.sqrt(fan_in)
        return jax.random.uniform(k, shape, jnp.float32, -bound, bound)

    return dict(
        sw1=u(keys[0], (K, DH, H), DH), sb1=u(keys[1], (K, 1, H), DH),
        sw2=u(keys[2], (K, H, H), H),   sb2=u(keys[3], (K, 1, H), H),
        sw3=u(keys[4], (K, H, DH), H),  sb3=u(keys[5], (K, 1, DH), H),
        tw1=u(keys[6], (K, DH, H), DH), tb1=u(keys[7], (K, 1, H), DH),
        tw2=u(keys[8], (K, H, H), H),   tb2=u(keys[9], (K, 1, H), H),
        tw3=u(keys[10], (K, H, DH), H), tb3=u(keys[11], (K, 1, DH), H),
    )


def pack_params(params):
    """Fold the even/odd selection + output placement permutations into the weights,
    fuse the s/t MLPs of each layer, and stack everything into ONE (K*RP, H2) slab.
    Called once, outside the per-call path."""
    layers = []
    for k in range(K):
        isl = _INPUT_SLOTS[k]          # slots feeding the MLP at layer k
        tsl = _TRANS_SLOTS[k]          # slots transformed at layer k
        blk = jnp.zeros((RP, H2), jnp.float32)

        # w1 rows [0, D): (D, 2H); rows of non-input slots stay zero
        blk = blk.at[isl, :H].set(params["sw1"][k])
        blk = blk.at[isl, H:].set(params["tw1"][k])

        # w2 rows [D, D+2H): block-diagonal (2H, 2H)
        blk = blk.at[D:D + H, :H].set(params["sw2"][k])
        blk = blk.at[D + H:D + H2, H:].set(params["tw2"][k])

        # w3 rows [D+2H, D+4H): s lands in lanes [0, D), t in [D, 2D),
        # columns of identity slots (and lanes >= 2D) stay zero.
        blk = blk.at[D + H2:D + H2 + H, tsl].set(params["sw3"][k])
        blk = blk.at[D + H2 + H:D + 2 * H2, D + tsl].set(params["tw3"][k])

        # biases: rows B_ROW (b1), B_ROW+1 (b2), B_ROW+2 (b3)
        blk = blk.at[B_ROW, :H].set(params["sb1"][k][0])
        blk = blk.at[B_ROW, H:].set(params["tb1"][k][0])
        blk = blk.at[B_ROW + 1, :H].set(params["sb2"][k][0])
        blk = blk.at[B_ROW + 1, H:].set(params["tb2"][k][0])
        blk = blk.at[B_ROW + 2, tsl].set(params["sb3"][k][0])
        blk = blk.at[B_ROW + 2, D + tsl].set(params["tb3"][k][0])

        layers.append(blk)
    return jnp.concatenate(layers, axis=0)           # (K*RP, H2)


def normalizing_flow_model_forward(x, packed_params):
    vmem = pl.BlockSpec(memory_space=pltpu.MemorySpace.VMEM)
    out = pl.pallas_call(
        nf_kernel,
        out_shape=jax.ShapeDtypeStruct((M, OUT_LANES), jnp.float32),
        in_specs=[vmem, vmem],
        out_specs=vmem,
    )(x, packed_params)

    # Un-permute zs from slot space back to the PyTorch column order (static gathers).
    zs = [out[:, k * D:(k + 1) * D][:, _POS2SLOT[k]] for k in range(K + 1)]
    prior_logprob = out[:, (K + 1) * D]
    log_det = out[:, (K + 1) * D + 1]
    return zs, prior_logprob, log_det


# --------------------------- pure-JAX reference -------------------------------
def _mlp_ref(x, w1, b1, w2, b2, w3, b3):
    h = _leaky_relu(jnp.dot(x, w1, preferred_element_type=jnp.float32) + b1)
    h = _leaky_relu(jnp.dot(h, w2, preferred_element_type=jnp.float32) + b2)
    return jnp.dot(h, w3, preferred_element_type=jnp.float32) + b3


def _forward_ref(x, params):
    logdet = jnp.zeros((M,), jnp.float32)
    zs = [x]
    for k in range(K):
        parity = k % 2
        x0, x1 = x[:, 0::2], x[:, 1::2]
        if parity:
            x0, x1 = x1, x0
        s = _mlp_ref(x0, params["sw1"][k], params["sb1"][k], params["sw2"][k],
                     params["sb2"][k], params["sw3"][k], params["sb3"][k])
        t = _mlp_ref(x0, params["tw1"][k], params["tb1"][k], params["tw2"][k],
                     params["tb2"][k], params["tw3"][k], params["tb3"][k])
        z0, z1 = x0, jnp.exp(s) * x1 + t
        if parity:
            z0, z1 = z1, z0
        x = jnp.concatenate([z0, z1], axis=1)
        logdet = logdet + jnp.sum(s, axis=1)
        zs.append(x)
    logprob = -0.5 * jnp.sum(x * x, axis=1) - 0.5 * D * LOG_2PI
    return zs, logprob, logdet


# ---------------------------------- main --------------------------------------
if __name__ == "__main__":
    key = jax.random.PRNGKey(0)
    k_x, k_p = jax.random.split(key)
    x = jax.random.normal(k_x, (M, D), jnp.float32)
    params = init_params(k_p)

    # hoist parameter packing out of the per-call path; jit the whole forward
    packed = jax.block_until_ready(pack_params(params))
    forward = jax.jit(normalizing_flow_model_forward)

    zs, prior_logprob, log_det = forward(x, packed)
    jax.block_until_ready(zs)
    jax.block_until_ready(prior_logprob)
    jax.block_until_ready(log_det)

    # correctness check vs pure-JAX reference (raw, unfolded parameters)
    zs_ref, lp_ref, ld_ref = _forward_ref(x, params)
    for a, b in zip(zs, zs_ref):
        assert jnp.allclose(a, b, atol=1e-5, rtol=1e-5)
    assert jnp.allclose(prior_logprob, lp_ref, atol=1e-5, rtol=1e-5)
    assert jnp.allclose(log_det, ld_ref, atol=1e-5, rtol=1e-5)

    # TODO(synk): backward()/sample() (inverse flow) are not part of this forward kernel.
    print("KERNEL_OK")
</pallas_src>

<mosaic_0001>
module attributes {stable_mosaic.version = 11 : i64} {
  func.func @nf_kernel(%arg0: memref<8x8xf32, #tpu.memory_space<vmem>>, %arg1: memref<576x64xf32, #tpu.memory_space<vmem>>, %arg2: memref<8x128xf32, #tpu.memory_space<vmem>>) attributes {dimension_semantics = [], scalar_prefetch = 0 : i64, scratch_operands = 0 : i64, tpu.core_type = #tpu.core_type<tc>} {
    %c0 = arith.constant 0 : index
    %c0_0 = arith.constant 0 : index
    %0 = vector.load %arg0[%c0, %c0_0] : memref<8x8xf32, #tpu.memory_space<vmem>>, vector<8x8xf32>
    %cst = arith.constant 0.000000e+00 : f32
    %1 = vector.broadcast %cst : f32 to vector<8x1xf32>
    %c0_1 = arith.constant 0 : index
    %c0_2 = arith.constant 0 : index
    %2 = vector.load %arg1[%c0_1, %c0_2] : memref<576x64xf32, #tpu.memory_space<vmem>>, vector<8x64xf32>
    %c8 = arith.constant 8 : index
    %c0_3 = arith.constant 0 : index
    %3 = vector.load %arg1[%c8, %c0_3] : memref<576x64xf32, #tpu.memory_space<vmem>>, vector<64x64xf32>
    %c72 = arith.constant 72 : index
    %c0_4 = arith.constant 0 : index
    %4 = vector.load %arg1[%c72, %c0_4] : memref<576x64xf32, #tpu.memory_space<vmem>>, vector<64x64xf32>
    %c136 = arith.constant 136 : index
    %c0_5 = arith.constant 0 : index
    %5 = vector.load %arg1[%c136, %c0_5] : memref<576x64xf32, #tpu.memory_space<vmem>>, vector<1x64xf32>
    %c137 = arith.constant 137 : index
    %c0_6 = arith.constant 0 : index
    %6 = vector.load %arg1[%c137, %c0_6] : memref<576x64xf32, #tpu.memory_space<vmem>>, vector<1x64xf32>
    %c138 = arith.constant 138 : index
    %c0_7 = arith.constant 0 : index
    %7 = vector.load %arg1[%c138, %c0_7] : memref<576x64xf32, #tpu.memory_space<vmem>>, vector<1x64xf32>
    %8 = vector.extract_strided_slice %0 {offsets = [0, 0], sizes = [8, 1], strides = [1, 1]} : vector<8x8xf32> to vector<8x1xf32>
    %9 = vector.extract_strided_slice %2 {offsets = [0, 0], sizes = [1, 64], strides = [1, 1]} : vector<8x64xf32> to vector<1x64xf32>
    %10 = vector.broadcast %8 : vector<8x1xf32> to vector<8x64xf32>
    %11 = vector.broadcast %9 : vector<1x64xf32> to vector<8x64xf32>
    %12 = arith.mulf %10, %11 : vector<8x64xf32>
    %13 = vector.extract_strided_slice %0 {offsets = [0, 1], sizes = [8, 1], strides = [1, 1]} : vector<8x8xf32> to vector<8x1xf32>
    %14 = vector.extract_strided_slice %2 {offsets = [1, 0], sizes = [1, 64], strides = [1, 1]} : vector<8x64xf32> to vector<1x64xf32>
    %15 = vector.broadcast %13 : vector<8x1xf32> to vector<8x64xf32>
    %16 = vector.broadcast %14 : vector<1x64xf32> to vector<8x64xf32>
    %17 = arith.mulf %15, %16 : vector<8x64xf32>
    %18 = vector.extract_strided_slice %0 {offsets = [0, 2], sizes = [8, 1], strides = [1, 1]} : vector<8x8xf32> to vector<8x1xf32>
    %19 = vector.extract_strided_slice %2 {offsets = [2, 0], sizes = [1, 64], strides = [1, 1]} : vector<8x64xf32> to vector<1x64xf32>
    %20 = vector.broadcast %18 : vector<8x1xf32> to vector<8x64xf32>
    %21 = vector.broadcast %19 : vector<1x64xf32> to vector<8x64xf32>
    %22 = arith.mulf %20, %21 : vector<8x64xf32>
    %23 = vector.extract_strided_slice %0 {offsets = [0, 3], sizes = [8, 1], strides = [1, 1]} : vector<8x8xf32> to vector<8x1xf32>
    %24 = vector.extract_strided_slice %2 {offsets = [3, 0], sizes = [1, 64], strides = [1, 1]} : vector<8x64xf32> to vector<1x64xf32>
    %25 = vector.broadcast %23 : vector<8x1xf32> to vector<8x64xf32>
    %26 = vector.broadcast %24 : vector<1x64xf32> to vector<8x64xf32>
    %27 = arith.mulf %25, %26 : vector<8x64xf32>
    %28 = vector.extract_strided_slice %0 {offsets = [0, 4], sizes = [8, 1], strides = [1, 1]} : vector<8x8xf32> to vector<8x1xf32>
    %29 = vector.extract_strided_slice %2 {offsets = [4, 0], sizes = [1, 64], strides = [1, 1]} : vector<8x64xf32> to vector<1x64xf32>
    %30 = vector.broadcast %28 : vector<8x1xf32> to vector<8x64xf32>
    %31 = vector.broadcast %29 : vector<1x64xf32> to vector<8x64xf32>
    %32 = arith.mulf %30, %31 : vector<8x64xf32>
    %33 = vector.extract_strided_slice %0 {offsets = [0, 5], sizes = [8, 1], strides = [1, 1]} : vector<8x8xf32> to vector<8x1xf32>
    %34 = vector.extract_strided_slice %2 {offsets = [5, 0], sizes = [1, 64], strides = [1, 1]} : vector<8x64xf32> to vector<1x64xf32>
    %35 = vector.broadcast %33 : vector<8x1xf32> to vector<8x64xf32>
    %36 = vector.broadcast %34 : vector<1x64xf32> to vector<8x64xf32>
    %37 = arith.mulf %35, %36 : vector<8x64xf32>
    %38 = vector.extract_strided_slice %0 {offsets = [0, 6], sizes = [8, 1], strides = [1, 1]} : vector<8x8xf32> to vector<8x1xf32>
    %39 = vector.extract_strided_slice %2 {offsets = [6, 0], sizes = [1, 64], strides = [1, 1]} : vector<8x64xf32> to vector<1x64xf32>
    %40 = vector.broadcast %38 : vector<8x1xf32> to vector<8x64xf32>
    %41 = vector.broadcast %39 : vector<1x64xf32> to vector<8x64xf32>
    %42 = arith.mulf %40, %41 : vector<8x64xf32>
    %43 = vector.extract_strided_slice %0 {offsets = [0, 7], sizes = [8, 1], strides = [1, 1]} : vector<8x8xf32> to vector<8x1xf32>
    %44 = vector.extract_strided_slice %2 {offsets = [7, 0], sizes = [1, 64], strides = [1, 1]} : vector<8x64xf32> to vector<1x64xf32>
    %45 = vector.broadcast %43 : vector<8x1xf32> to vector<8x64xf32>
    %46 = vector.broadcast %44 : vector<1x64xf32> to vector<8x64xf32>
    %47 = arith.mulf %45, %46 : vector<8x64xf32>
    %48 = arith.addf %12, %17 : vector<8x64xf32>
    %49 = arith.addf %22, %27 : vector<8x64xf32>
    %50 = arith.addf %32, %37 : vector<8x64xf32>
    %51 = arith.addf %42, %47 : vector<8x64xf32>
    %52 = arith.addf %48, %49 : vector<8x64xf32>
    %53 = arith.addf %50, %51 : vector<8x64xf32>
    %54 = arith.addf %52, %53 : vector<8x64xf32>
    %55 = vector.broadcast %5 : vector<1x64xf32> to vector<8x64xf32>
    %56 = arith.addf %54, %55 : vector<8x64xf32>
    %cst_8 = arith.constant 0.000000e+00 : f32
    %57 = vector.broadcast %cst_8 : f32 to vector<8x64xf32>
    %58 = arith.cmpf oge, %56, %57 : vector<8x64xf32>
    %cst_9 = arith.constant 2.000000e-01 : f32
    %59 = vector.broadcast %cst_9 : f32 to vector<8x64xf32>
    %60 = arith.mulf %59, %56 : vector<8x64xf32>
    %61 = arith.select %58, %56, %60 : vector<8x64xi1>, vector<8x64xf32>
    %cst_10 = arith.constant dense<0.000000e+00> : vector<8x64xf32>
    %62 = tpu.matmul %61, %3, %cst_10 {dimension_numbers = #tpu.dot_dimension_numbers<[1], [0], [0], [1], [0, 0, 1, 1], [], []>} : vector<8x64xf32>, vector<64x64xf32>, vector<8x64xf32> -> vector<8x64xf32>
    %63 = vector.broadcast %6 : vector<1x64xf32> to vector<8x64xf32>
    %64 = arith.addf %62, %63 : vector<8x64xf32>
    %cst_11 = arith.constant 0.000000e+00 : f32
    %65 = vector.broadcast %cst_11 : f32 to vector<8x64xf32>
    %66 = arith.cmpf oge, %64, %65 : vector<8x64xf32>
    %cst_12 = arith.constant 2.000000e-01 : f32
    %67 = vector.broadcast %cst_12 : f32 to vector<8x64xf32>
    %68 = arith.mulf %67, %64 : vector<8x64xf32>
    %69 = arith.select %66, %64, %68 : vector<8x64xi1>, vector<8x64xf32>
    %cst_13 = arith.constant dense<0.000000e+00> : vector<8x64xf32>
    %70 = tpu.matmul %69, %4, %cst_13 {dimension_numbers = #tpu.dot_dimension_numbers<[1], [0], [0], [1], [0, 0, 1, 1], [], []>} : vector<8x64xf32>, vector<64x64xf32>, vector<8x64xf32> -> vector<8x64xf32>
    %71 = vector.broadcast %7 : vector<1x64xf32> to vector<8x64xf32>
    %72 = arith.addf %70, %71 : vector<8x64xf32>
    %73 = vector.extract_strided_slice %72 {offsets = [0, 0], sizes = [8, 8], strides = [1, 1]} : vector<8x64xf32> to vector<8x8xf32>
    %74 = vector.extract_strided_slice %72 {offsets = [0, 8], sizes = [8, 8], strides = [1, 1]} : vector<8x64xf32> to vector<8x8xf32>
    %75 = math.exp %73 : vector<8x8xf32>
    %76 = arith.mulf %75, %0 : vector<8x8xf32>
    %77 = arith.addf %76, %74 : vector<8x8xf32>
    %cst_14 = arith.constant dense<0.000000e+00> : vector<8xf32>
    %78 = vector.multi_reduction <add>, %73, %cst_14 [1] : vector<8x8xf32> to vector<8xf32>
    %79 = vector.shape_cast %78 : vector<8xf32> to vector<8x1xf32>
    %80 = arith.addf %1, %79 : vector<8x1xf32>
    %c144 = arith.constant 144 : index
    %c0_15 = arith.constant 0 : index
    %81 = vector.load %arg1[%c144, %c0_15] : memref<576x64xf32, #tpu.memory_space<vmem>>, vector<8x64xf32>
    %c152 = arith.constant 152 : index
    %c0_16 = arith.constant 0 : index
    %82 = vector.load %arg1[%c152, %c0_16] : memref<576x64xf32, #tpu.memory_space<vmem>>, vector<64x64xf32>
    %c216 = arith.constant 216 : index
    %c0_17 = arith.constant 0 : index
    %83 = vector.load %arg1[%c216, %c0_17] : memref<576x64xf32, #tpu.memory_space<vmem>>, vector<64x64xf32>
    %c280 = arith.constant 280 : index
    %c0_18 = arith.constant 0 : index
    %84 = vector.load %arg1[%c280, %c0_18] : memref<576x64xf32, #tpu.memory_space<vmem>>, vector<1x64xf32>
    %c281 = arith.constant 281 : index
    %c0_19 = arith.constant 0 : index
    %85 = vector.load %arg1[%c281, %c0_19] : memref<576x64xf32, #tpu.memory_space<vmem>>, vector<1x64xf32>
    %c282 = arith.constant 282 : index
    %c0_20 = arith.constant 0 : index
    %86 = vector.load %arg1[%c282, %c0_20] : memref<576x64xf32, #tpu.memory_space<vmem>>, vector<1x64xf32>
    %87 = vector.extract_strided_slice %77 {offsets = [0, 0], sizes = [8, 1], strides = [1, 1]} : vector<8x8xf32> to vector<8x1xf32>
    %88 = vector.extract_strided_slice %81 {offsets = [0, 0], sizes = [1, 64], strides = [1, 1]} : vector<8x64xf32> to vector<1x64xf32>
    %89 = vector.broadcast %87 : vector<8x1xf32> to vector<8x64xf32>
    %90 = vector.broadcast %88 : vector<1x64xf32> to vector<8x64xf32>
    %91 = arith.mulf %89, %90 : vector<8x64xf32>
    %92 = vector.extract_strided_slice %77 {offsets = [0, 1], sizes = [8, 1], strides = [1, 1]} : vector<8x8xf32> to vector<8x1xf32>
    %93 = vector.extract_strided_slice %81 {offsets = [1, 0], sizes = [1, 64], strides = [1, 1]} : vector<8x64xf32> to vector<1x64xf32>
    %94 = vector.broadcast %92 : vector<8x1xf32> to vector<8x64xf32>
    %95 = vector.broadcast %93 : vector<1x64xf32> to vector<8x64xf32>
    %96 = arith.mulf %94, %95 : vector<8x64xf32>
    %97 = vector.extract_strided_slice %77 {offsets = [0, 2], sizes = [8, 1], strides = [1, 1]} : vector<8x8xf32> to vector<8x1xf32>
    %98 = vector.extract_strided_slice %81 {offsets = [2, 0], sizes = [1, 64], strides = [1, 1]} : vector<8x64xf32> to vector<1x64xf32>
    %99 = vector.broadcast %97 : vector<8x1xf32> to vector<8x64xf32>
    %100 = vector.broadcast %98 : vector<1x64xf32> to vector<8x64xf32>
    %101 = arith.mulf %99, %100 : vector<8x64xf32>
    %102 = vector.extract_strided_slice %77 {offsets = [0, 3], sizes = [8, 1], strides = [1, 1]} : vector<8x8xf32> to vector<8x1xf32>
    %103 = vector.extract_strided_slice %81 {offsets = [3, 0], sizes = [1, 64], strides = [1, 1]} : vector<8x64xf32> to vector<1x64xf32>
    %104 = vector.broadcast %102 : vector<8x1xf32> to vector<8x64xf32>
    %105 = vector.broadcast %103 : vector<1x64xf32> to vector<8x64xf32>
    %106 = arith.mulf %104, %105 : vector<8x64xf32>
    %107 = vector.extract_strided_slice %77 {offsets = [0, 4], sizes = [8, 1], strides = [1, 1]} : vector<8x8xf32> to vector<8x1xf32>
    %108 = vector.extract_strided_slice %81 {offsets = [4, 0], sizes = [1, 64], strides = [1, 1]} : vector<8x64xf32> to vector<1x64xf32>
    %109 = vector.broadcast %107 : vector<8x1xf32> to vector<8x64xf32>
    %110 = vector.broadcast %108 : vector<1x64xf32> to vector<8x64xf32>
    %111 = arith.mulf %109, %110 : vector<8x64xf32>
    %112 = vector.extract_strided_slice %77 {offsets = [0, 5], sizes = [8, 1], strides = [1, 1]} : vector<8x8xf32> to vector<8x1xf32>
    %113 = vector.extract_strided_slice %81 {offsets = [5, 0], sizes = [1, 64], strides = [1, 1]} : vector<8x64xf32> to vector<1x64xf32>
    %114 = vector.broadcast %112 : vector<8x1xf32> to vector<8x64xf32>
    %115 = vector.broadcast %113 : vector<1x64xf32> to vector<8x64xf32>
    %116 = arith.mulf %114, %115 : vector<8x64xf32>
    %117 = vector.extract_strided_slice %77 {offsets = [0, 6], sizes = [8, 1], strides = [1, 1]} : vector<8x8xf32> to vector<8x1xf32>
    %118 = vector.extract_strided_slice %81 {offsets = [6, 0], sizes = [1, 64], strides = [1, 1]} : vector<8x64xf32> to vector<1x64xf32>
    %119 = vector.broadcast %117 : vector<8x1xf32> to vector<8x64xf32>
    %120 = vector.broadcast %118 : vector<1x64xf32> to vector<8x64xf32>
    %121 = arith.mulf %119, %120 : vector<8x64xf32>
    %122 = vector.extract_strided_slice %77 {offsets = [0, 7], sizes = [8, 1], strides = [1, 1]} : vector<8x8xf32> to vector<8x1xf32>
    %123 = vector.extract_strided_slice %81 {offsets = [7, 0], sizes = [1, 64], strides = [1, 1]} : vector<8x64xf32> to vector<1x64xf32>
    %124 = vector.broadcast %122 : vector<8x1xf32> to vector<8x64xf32>
    %125 = vector.broadcast %123 : vector<1x64xf32> to vector<8x64xf32>
    %126 = arith.mulf %124, %125 : vector<8x64xf32>
    %127 = arith.addf %91, %96 : vector<8x64xf32>
    %128 = arith.addf %101, %106 : vector<8x64xf32>
    %129 = arith.addf %111, %116 : vector<8x64xf32>
    %130 = arith.addf %121, %126 : vector<8x64xf32>
    %131 = arith.addf %127, %128 : vector<8x64xf32>
    %132 = arith.addf %129, %130 : vector<8x64xf32>
    %133 = arith.addf %131, %132 : vector<8x64xf32>
    %134 = vector.broadcast %84 : vector<1x64xf32> to vector<8x64xf32>
    %135 = arith.addf %133, %134 : vector<8x64xf32>
    %cst_21 = arith.constant 0.000000e+00 : f32
    %136 = vector.broadcast %cst_21 : f32 to vector<8x64xf32>
    %137 = arith.cmpf oge, %135, %136 : vector<8x64xf32>
    %cst_22 = arith.constant 2.000000e-01 : f32
    %138 = vector.broadcast %cst_22 : f32 to vector<8x64xf32>
    %139 = arith.mulf %138, %135 : vector<8x64xf32>
    %140 = arith.select %137, %135, %139 : vector<8x64xi1>, vector<8x64xf32>
    %cst_23 = arith.constant dense<0.000000e+00> : vector<8x64xf32>
    %141 = tpu.matmul %140, %82, %cst_23 {dimension_numbers = #tpu.dot_dimension_numbers<[1], [0], [0], [1], [0, 0, 1, 1], [], []>} : vector<8x64xf32>, vector<64x64xf32>, vector<8x64xf32> -> vector<8x64xf32>
    %142 = vector.broadcast %85 : vector<1x64xf32> to vector<8x64xf32>
    %143 = arith.addf %141, %142 : vector<8x64xf32>
    %cst_24 = arith.constant 0.000000e+00 : f32
    %144 = vector.broadcast %cst_24 : f32 to vector<8x64xf32>
    %145 = arith.cmpf oge, %143, %144 : vector<8x64xf32>
    %cst_25 = arith.constant 2.000000e-01 : f32
    %146 = vector.broadcast %cst_25 : f32 to vector<8x64xf32>
    %147 = arith.mulf %146, %143 : vector<8x64xf32>
    %148 = arith.select %145, %143, %147 : vector<8x64xi1>, vector<8x64xf32>
    %cst_26 = arith.constant dense<0.000000e+00> : vector<8x64xf32>
    %149 = tpu.matmul %148, %83, %cst_26 {dimension_numbers = #tpu.dot_dimension_numbers<[1], [0], [0], [1], [0, 0, 1, 1], [], []>} : vector<8x64xf32>, vector<64x64xf32>, vector<8x64xf32> -> vector<8x64xf32>
    %150 = vector.broadcast %86 : vector<1x64xf32> to vector<8x64xf32>
    %151 = arith.addf %149, %150 : vector<8x64xf32>
    %152 = vector.extract_strided_slice %151 {offsets = [0, 0], sizes = [8, 8], strides = [1, 1]} : vector<8x64xf32> to vector<8x8xf32>
    %153 = vector.extract_strided_slice %151 {offsets = [0, 8], sizes = [8, 8], strides = [1, 1]} : vector<8x64xf32> to vector<8x8xf32>
    %154 = math.exp %152 : vector<8x8xf32>
    %155 = arith.mulf %154, %77 : vector<8x8xf32>
    %156 = arith.addf %155, %153 : vector<8x8xf32>
    %cst_27 = arith.constant dense<0.000000e+00> : vector<8xf32>
    %157 = vector.multi_reduction <add>, %152, %cst_27 [1] : vector<8x8xf32> to vector<8xf32>
    %158 = vector.shape_cast %157 : vector<8xf32> to vector<8x1xf32>
    %159 = arith.addf %80, %158 : vector<8x1xf32>
    %c288 = arith.constant 288 : index
    %c0_28 = arith.constant 0 : index
    %160 = vector.load %arg1[%c288, %c0_28] : memref<576x64xf32, #tpu.memory_space<vmem>>, vector<8x64xf32>
    %c296 = arith.constant 296 : index
    %c0_29 = arith.constant 0 : index
    %161 = vector.load %arg1[%c296, %c0_29] : memref<576x64xf32, #tpu.memory_space<vmem>>, vector<64x64xf32>
    %c360 = arith.constant 360 : index
    %c0_30 = arith.constant 0 : index
    %162 = vector.load %arg1[%c360, %c0_30] : memref<576x64xf32, #tpu.memory_space<vmem>>, vector<64x64xf32>
    %c424 = arith.constant 424 : index
    %c0_31 = arith.constant 0 : index
    %163 = vector.load %arg1[%c424, %c0_31] : memref<576x64xf32, #tpu.memory_space<vmem>>, vector<1x64xf32>
    %c425 = arith.constant 425 : index
    %c0_32 = arith.constant 0 : index
    %164 = vector.load %arg1[%c425, %c0_32] : memref<576x64xf32, #tpu.memory_space<vmem>>, vector<1x64xf32>
    %c426 = arith.constant 426 : index
    %c0_33 = arith.constant 0 : index
    %165 = vector.load %arg1[%c426, %c0_33] : memref<576x64xf32, #tpu.memory_space<vmem>>, vector<1x64xf32>
    %166 = vector.extract_strided_slice %156 {offsets = [0, 0], sizes = [8, 1], strides = [1, 1]} : vector<8x8xf32> to vector<8x1xf32>
    %167 = vector.extract_strided_slice %160 {offsets = [0, 0], sizes = [1, 64], strides = [1, 1]} : vector<8x64xf32> to vector<1x64xf32>
    %168 = vector.broadcast %166 : vector<8x1xf32> to vector<8x64xf32>
    %169 = vector.broadcast %167 : vector<1x64xf32> to vector<8x64xf32>
    %170 = arith.mulf %168, %169 : vector<8x64xf32>
    %171 = vector.extract_strided_slice %156 {offsets = [0, 1], sizes = [8, 1], strides = [1, 1]} : vector<8x8xf32> to vector<8x1xf32>
    %172 = vector.extract_strided_slice %160 {offsets = [1, 0], sizes = [1, 64], strides = [1, 1]} : vector<8x64xf32> to vector<1x64xf32>
    %173 = vector.broadcast %171 : vector<8x1xf32> to vector<8x64xf32>
    %174 = vector.broadcast %172 : vector<1x64xf32> to vector<8x64xf32>
    %175 = arith.mulf %173, %174 : vector<8x64xf32>
    %176 = vector.extract_strided_slice %156 {offsets = [0, 2], sizes = [8, 1], strides = [1, 1]} : vector<8x8xf32> to vector<8x1xf32>
    %177 = vector.extract_strided_slice %160 {offsets = [2, 0], sizes = [1, 64], strides = [1, 1]} : vector<8x64xf32> to vector<1x64xf32>
    %178 = vector.broadcast %176 : vector<8x1xf32> to vector<8x64xf32>
    %179 = vector.broadcast %177 : vector<1x64xf32> to vector<8x64xf32>
    %180 = arith.mulf %178, %179 : vector<8x64xf32>
    %181 = vector.extract_strided_slice %156 {offsets = [0, 3], sizes = [8, 1], strides = [1, 1]} : vector<8x8xf32> to vector<8x1xf32>
    %182 = vector.extract_strided_slice %160 {offsets = [3, 0], sizes = [1, 64], strides = [1, 1]} : vector<8x64xf32> to vector<1x64xf32>
    %183 = vector.broadcast %181 : vector<8x1xf32> to vector<8x64xf32>
    %184 = vector.broadcast %182 : vector<1x64xf32> to vector<8x64xf32>
    %185 = arith.mulf %183, %184 : vector<8x64xf32>
    %186 = vector.extract_strided_slice %156 {offsets = [0, 4], sizes = [8, 1], strides = [1, 1]} : vector<8x8xf32> to vector<8x1xf32>
    %187 = vector.extract_strided_slice %160 {offsets = [4, 0], sizes = [1, 64], strides = [1, 1]} : vector<8x64xf32> to vector<1x64xf32>
    %188 = vector.broadcast %186 : vector<8x1xf32> to vector<8x64xf32>
    %189 = vector.broadcast %187 : vector<1x64xf32> to vector<8x64xf32>
    %190 = arith.mulf %188, %189 : vector<8x64xf32>
    %191 = vector.extract_strided_slice %156 {offsets = [0, 5], sizes = [8, 1], strides = [1, 1]} : vector<8x8xf32> to vector<8x1xf32>
    %192 = vector.extract_strided_slice %160 {offsets = [5, 0], sizes = [1, 64], strides = [1, 1]} : vector<8x64xf32> to vector<1x64xf32>
    %193 = vector.broadcast %191 : vector<8x1xf32> to vector<8x64xf32>
    %194 = vector.broadcast %192 : vector<1x64xf32> to vector<8x64xf32>
    %195 = arith.mulf %193, %194 : vector<8x64xf32>
    %196 = vector.extract_strided_slice %156 {offsets = [0, 6], sizes = [8, 1], strides = [1, 1]} : vector<8x8xf32> to vector<8x1xf32>
    %197 = vector.extract_strided_slice %160 {offsets = [6, 0], sizes = [1, 64], strides = [1, 1]} : vector<8x64xf32> to vector<1x64xf32>
    %198 = vector.broadcast %196 : vector<8x1xf32> to vector<8x64xf32>
    %199 = vector.broadcast %197 : vector<1x64xf32> to vector<8x64xf32>
    %200 = arith.mulf %198, %199 : vector<8x64xf32>
    %201 = vector.extract_strided_slice %156 {offsets = [0, 7], sizes = [8, 1], strides = [1, 1]} : vector<8x8xf32> to vector<8x1xf32>
    %202 = vector.extract_strided_slice %160 {offsets = [7, 0], sizes = [1, 64], strides = [1, 1]} : vector<8x64xf32> to vector<1x64xf32>
    %203 = vector.broadcast %201 : vector<8x1xf32> to vector<8x64xf32>
    %204 = vector.broadcast %202 : vector<1x64xf32> to vector<8x64xf32>
    %205 = arith.mulf %203, %204 : vector<8x64xf32>
    %206 = arith.addf %170, %175 : vector<8x64xf32>
    %207 = arith.addf %180, %185 : vector<8x64xf32>
    %208 = arith.addf %190, %195 : vector<8x64xf32>
    %209 = arith.addf %200, %205 : vector<8x64xf32>
    %210 = arith.addf %206, %207 : vector<8x64xf32>
    %211 = arith.addf %208, %209 : vector<8x64xf32>
    %212 = arith.addf %210, %211 : vector<8x64xf32>
    %213 = vector.broadcast %163 : vector<1x64xf32> to vector<8x64xf32>
    %214 = arith.addf %212, %213 : vector<8x64xf32>
    %cst_34 = arith.constant 0.000000e+00 : f32
    %215 = vector.broadcast %cst_34 : f32 to vector<8x64xf32>
    %216 = arith.cmpf oge, %214, %215 : vector<8x64xf32>
    %cst_35 = arith.constant 2.000000e-01 : f32
    %217 = vector.broadcast %cst_35 : f32 to vector<8x64xf32>
    %218 = arith.mulf %217, %214 : vector<8x64xf32>
    %219 = arith.select %216, %214, %218 : vector<8x64xi1>, vector<8x64xf32>
    %cst_36 = arith.constant dense<0.000000e+00> : vector<8x64xf32>
    %220 = tpu.matmul %219, %161, %cst_36 {dimension_numbers = #tpu.dot_dimension_numbers<[1], [0], [0], [1], [0, 0, 1, 1], [], []>} : vector<8x64xf32>, vector<64x64xf32>, vector<8x64xf32> -> vector<8x64xf32>
    %221 = vector.broadcast %164 : vector<1x64xf32> to vector<8x64xf32>
    %222 = arith.addf %220, %221 : vector<8x64xf32>
    %cst_37 = arith.constant 0.000000e+00 : f32
    %223 = vector.broadcast %cst_37 : f32 to vector<8x64xf32>
    %224 = arith.cmpf oge, %222, %223 : vector<8x64xf32>
    %cst_38 = arith.constant 2.000000e-01 : f32
    %225 = vector.broadcast %cst_38 : f32 to vector<8x64xf32>
    %226 = arith.mulf %225, %222 : vector<8x64xf32>
    %227 = arith.select %224, %222, %226 : vector<8x64xi1>, vector<8x64xf32>
    %cst_39 = arith.constant dense<0.000000e+00> : vector<8x64xf32>
    %228 = tpu.matmul %227, %162, %cst_39 {dimension_numbers = #tpu.dot_dimension_numbers<[1], [0], [0], [1], [0, 0, 1, 1], [], []>} : vector<8x64xf32>, vector<64x64xf32>, vector<8x64xf32> -> vector<8x64xf32>
    %229 = vector.broadcast %165 : vector<1x64xf32> to vector<8x64xf32>
    %230 = arith.addf %228, %229 : vector<8x64xf32>
    %231 = vector.extract_strided_slice %230 {offsets = [0, 0], sizes = [8, 8], strides = [1, 1]} : vector<8x64xf32> to vector<8x8xf32>
    %232 = vector.extract_strided_slice %230 {offsets = [0, 8], sizes = [8, 8], strides = [1, 1]} : vector<8x64xf32> to vector<8x8xf32>
    %233 = math.exp %231 : vector<8x8xf32>
    %234 = arith.mulf %233, %156 : vector<8x8xf32>
    %235 = arith.addf %234, %232 : vector<8x8xf32>
    %cst_40 = arith.constant dense<0.000000e+00> : vector<8xf32>
    %236 = vector.multi_reduction <add>, %231, %cst_40 [1] : vector<8x8xf32> to vector<8xf32>
    %237 = vector.shape_cast %236 : vector<8xf32> to vector<8x1xf32>
    %238 = arith.addf %159, %237 : vector<8x1xf32>
    %c432 = arith.constant 432 : index
    %c0_41 = arith.constant 0 : index
    %239 = vector.load %arg1[%c432, %c0_41] : memref<576x64xf32, #tpu.memory_space<vmem>>, vector<8x64xf32>
    %c440 = arith.constant 440 : index
    %c0_42 = arith.constant 0 : index
    %240 = vector.load %arg1[%c440, %c0_42] : memref<576x64xf32, #tpu.memory_space<vmem>>, vector<64x64xf32>
    %c504 = arith.constant 504 : index
    %c0_43 = arith.constant 0 : index
    %241 = vector.load %arg1[%c504, %c0_43] : memref<576x64xf32, #tpu.memory_space<vmem>>, vector<64x64xf32>
    %c568 = arith.constant 568 : index
    %c0_44 = arith.constant 0 : index
    %242 = vector.load %arg1[%c568, %c0_44] : memref<576x64xf32, #tpu.memory_space<vmem>>, vector<1x64xf32>
    %c569 = arith.constant 569 : index
    %c0_45 = arith.constant 0 : index
    %243 = vector.load %arg1[%c569, %c0_45] : memref<576x64xf32, #tpu.memory_space<vmem>>, vector<1x64xf32>
    %c570 = arith.constant 570 : index
    %c0_46 = arith.constant 0 : index
    %244 = vector.load %arg1[%c570, %c0_46] : memref<576x64xf32, #tpu.memory_space<vmem>>, vector<1x64xf32>
    %245 = vector.extract_strided_slice %235 {offsets = [0, 0], sizes = [8, 1], strides = [1, 1]} : vector<8x8xf32> to vector<8x1xf32>
    %246 = vector.extract_strided_slice %239 {offsets = [0, 0], sizes = [1, 64], strides = [1, 1]} : vector<8x64xf32> to vector<1x64xf32>
    %247 = vector.broadcast %245 : vector<8x1xf32> to vector<8x64xf32>
    %248 = vector.broadcast %246 : vector<1x64xf32> to vector<8x64xf32>
    %249 = arith.mulf %247, %248 : vector<8x64xf32>
    %250 = vector.extract_strided_slice %235 {offsets = [0, 1], sizes = [8, 1], strides = [1, 1]} : vector<8x8xf32> to vector<8x1xf32>
    %251 = vector.extract_strided_slice %239 {offsets = [1, 0], sizes = [1, 64], strides = [1, 1]} : vector<8x64xf32> to vector<1x64xf32>
    %252 = vector.broadcast %250 : vector<8x1xf32> to vector<8x64xf32>
    %253 = vector.broadcast %251 : vector<1x64xf32> to vector<8x64xf32>
    %254 = arith.mulf %252, %253 : vector<8x64xf32>
    %255 = vector.extract_strided_slice %235 {offsets = [0, 2], sizes = [8, 1], strides = [1, 1]} : vector<8x8xf32> to vector<8x1xf32>
    %256 = vector.extract_strided_slice %239 {offsets = [2, 0], sizes = [1, 64], strides = [1, 1]} : vector<8x64xf32> to vector<1x64xf32>
    %257 = vector.broadcast %255 : vector<8x1xf32> to vector<8x64xf32>
    %258 = vector.broadcast %256 : vector<1x64xf32> to vector<8x64xf32>
    %259 = arith.mulf %257, %258 : vector<8x64xf32>
    %260 = vector.extract_strided_slice %235 {offsets = [0, 3], sizes = [8, 1], strides = [1, 1]} : vector<8x8xf32> to vector<8x1xf32>
    %261 = vector.extract_strided_slice %239 {offsets = [3, 0], sizes = [1, 64], strides = [1, 1]} : vector<8x64xf32> to vector<1x64xf32>
    %262 = vector.broadcast %260 : vector<8x1xf32> to vector<8x64xf32>
    %263 = vector.broadcast %261 : vector<1x64xf32> to vector<8x64xf32>
    %264 = arith.mulf %262, %263 : vector<8x64xf32>
    %265 = vector.extract_strided_slice %235 {offsets = [0, 4], sizes = [8, 1], strides = [1, 1]} : vector<8x8xf32> to vector<8x1xf32>
    %266 = vector.extract_strided_slice %239 {offsets = [4, 0], sizes = [1, 64], strides = [1, 1]} : vector<8x64xf32> to vector<1x64xf32>
    %267 = vector.broadcast %265 : vector<8x1xf32> to vector<8x64xf32>
    %268 = vector.broadcast %266 : vector<1x64xf32> to vector<8x64xf32>
    %269 = arith.mulf %267, %268 : vector<8x64xf32>
    %270 = vector.extract_strided_slice %235 {offsets = [0, 5], sizes = [8, 1], strides = [1, 1]} : vector<8x8xf32> to vector<8x1xf32>
    %271 = vector.extract_strided_slice %239 {offsets = [5, 0], sizes = [1, 64], strides = [1, 1]} : vector<8x64xf32> to vector<1x64xf32>
    %272 = vector.broadcast %270 : vector<8x1xf32> to vector<8x64xf32>
    %273 = vector.broadcast %271 : vector<1x64xf32> to vector<8x64xf32>
    %274 = arith.mulf %272, %273 : vector<8x64xf32>
    %275 = vector.extract_strided_slice %235 {offsets = [0, 6], sizes = [8, 1], strides = [1, 1]} : vector<8x8xf32> to vector<8x1xf32>
    %276 = vector.extract_strided_slice %239 {offsets = [6, 0], sizes = [1, 64], strides = [1, 1]} : vector<8x64xf32> to vector<1x64xf32>
    %277 = vector.broadcast %275 : vector<8x1xf32> to vector<8x64xf32>
    %278 = vector.broadcast %276 : vector<1x64xf32> to vector<8x64xf32>
    %279 = arith.mulf %277, %278 : vector<8x64xf32>
    %280 = vector.extract_strided_slice %235 {offsets = [0, 7], sizes = [8, 1], strides = [1, 1]} : vector<8x8xf32> to vector<8x1xf32>
    %281 = vector.extract_strided_slice %239 {offsets = [7, 0], sizes = [1, 64], strides = [1, 1]} : vector<8x64xf32> to vector<1x64xf32>
    %282 = vector.broadcast %280 : vector<8x1xf32> to vector<8x64xf32>
    %283 = vector.broadcast %281 : vector<1x64xf32> to vector<8x64xf32>
    %284 = arith.mulf %282, %283 : vector<8x64xf32>
    %285 = arith.addf %249, %254 : vector<8x64xf32>
    %286 = arith.addf %259, %264 : vector<8x64xf32>
    %287 = arith.addf %269, %274 : vector<8x64xf32>
    %288 = arith.addf %279, %284 : vector<8x64xf32>
    %289 = arith.addf %285, %286 : vector<8x64xf32>
    %290 = arith.addf %287, %288 : vector<8x64xf32>
    %291 = arith.addf %289, %290 : vector<8x64xf32>
    %292 = vector.broadcast %242 : vector<1x64xf32> to vector<8x64xf32>
    %293 = arith.addf %291, %292 : vector<8x64xf32>
    %cst_47 = arith.constant 0.000000e+00 : f32
    %294 = vector.broadcast %cst_47 : f32 to vector<8x64xf32>
    %295 = arith.cmpf oge, %293, %294 : vector<8x64xf32>
    %cst_48 = arith.constant 2.000000e-01 : f32
    %296 = vector.broadcast %cst_48 : f32 to vector<8x64xf32>
    %297 = arith.mulf %296, %293 : vector<8x64xf32>
    %298 = arith.select %295, %293, %297 : vector<8x64xi1>, vector<8x64xf32>
    %cst_49 = arith.constant dense<0.000000e+00> : vector<8x64xf32>
    %299 = tpu.matmul %298, %240, %cst_49 {dimension_numbers = #tpu.dot_dimension_numbers<[1], [0], [0], [1], [0, 0, 1, 1], [], []>} : vector<8x64xf32>, vector<64x64xf32>, vector<8x64xf32> -> vector<8x64xf32>
    %300 = vector.broadcast %243 : vector<1x64xf32> to vector<8x64xf32>
    %301 = arith.addf %299, %300 : vector<8x64xf32>
    %cst_50 = arith.constant 0.000000e+00 : f32
    %302 = vector.broadcast %cst_50 : f32 to vector<8x64xf32>
    %303 = arith.cmpf oge, %301, %302 : vector<8x64xf32>
    %cst_51 = arith.constant 2.000000e-01 : f32
    %304 = vector.broadcast %cst_51 : f32 to vector<8x64xf32>
    %305 = arith.mulf %304, %301 : vector<8x64xf32>
    %306 = arith.select %303, %301, %305 : vector<8x64xi1>, vector<8x64xf32>
    %cst_52 = arith.constant dense<0.000000e+00> : vector<8x64xf32>
    %307 = tpu.matmul %306, %241, %cst_52 {dimension_numbers = #tpu.dot_dimension_numbers<[1], [0], [0], [1], [0, 0, 1, 1], [], []>} : vector<8x64xf32>, vector<64x64xf32>, vector<8x64xf32> -> vector<8x64xf32>
    %308 = vector.broadcast %244 : vector<1x64xf32> to vector<8x64xf32>
    %309 = arith.addf %307, %308 : vector<8x64xf32>
    %310 = vector.extract_strided_slice %309 {offsets = [0, 0], sizes = [8, 8], strides = [1, 1]} : vector<8x64xf32> to vector<8x8xf32>
    %311 = vector.extract_strided_slice %309 {offsets = [0, 8], sizes = [8, 8], strides = [1, 1]} : vector<8x64xf32> to vector<8x8xf32>
    %312 = math.exp %310 : vector<8x8xf32>
    %313 = arith.mulf %312, %235 : vector<8x8xf32>
    %314 = arith.addf %313, %311 : vector<8x8xf32>
    %cst_53 = arith.constant dense<0.000000e+00> : vector<8xf32>
    %315 = vector.multi_reduction <add>, %310, %cst_53 [1] : vector<8x8xf32> to vector<8xf32>
    %316 = vector.shape_cast %315 : vector<8xf32> to vector<8x1xf32>
    %317 = arith.addf %238, %316 : vector<8x1xf32>
    %318 = arith.mulf %314, %314 : vector<8x8xf32>
    %cst_54 = arith.constant dense<0.000000e+00> : vector<8xf32>
    %319 = vector.multi_reduction <add>, %318, %cst_54 [1] : vector<8x8xf32> to vector<8xf32>
    %320 = vector.shape_cast %319 : vector<8xf32> to vector<8x1xf32>
    %cst_55 = arith.constant -5.000000e-01 : f32
    %321 = vector.broadcast %cst_55 : f32 to vector<8x1xf32>
    %322 = arith.mulf %321, %320 : vector<8x1xf32>
    %cst_56 = arith.constant 7.35150814 : f32
    %323 = vector.broadcast %cst_56 : f32 to vector<8x1xf32>
    %324 = arith.subf %322, %323 : vector<8x1xf32>
    %cst_57 = arith.constant 0.000000e+00 : f32
    %325 = vector.broadcast %cst_57 : f32 to vector<8x86xf32>
    %326 = tpu.concatenate %0, %77, %156, %235, %314, %324, %317, %325 in 1 : vector<8x8xf32>, vector<8x8xf32>, vector<8x8xf32>, vector<8x8xf32>, vector<8x8xf32>, vector<8x1xf32>, vector<8x1xf32>, vector<8x86xf32> -> vector<8x128xf32>
    %c0_58 = arith.constant 0 : index
    %c0_59 = arith.constant 0 : index
    %327 = vector.load %arg2[%c0_58, %c0_59] : memref<8x128xf32, #tpu.memory_space<vmem>>, vector<8x128xf32>
    tpu.vector_store %arg2[%c0_58, %c0_59], %326 {strides = array<i32>} : memref<8x128xf32, #tpu.memory_space<vmem>>, vector<8x128xf32>,
    return
  }
}

</mosaic_0001>

<llo_original>
// kernel: normalizing_flow_model_forward.1
$region0: #{normalizing_flow_model_forward.1}
  #allocation0 [shape = 'u32[]', space=smem, size = 0x4, offset = 0x4, fixed_abs, tag = 'smem constant byte address 0x4 - core index']
  #allocation1 [shape = 'u32[144,128]{1,0:T(1,128)}', space=vmem, size = 0x12000, scoped, tag = 'internal scratch']
  %s0 = inlined_call_operand.vmem [shape: f32[8,8], index: 0, kind: input, shape index: {}]
  %s1 = inlined_call_operand.vmem [shape: f32[576,64], index: 1, kind: input, shape index: {}]
  %s2 = inlined_call_operand.vmem [shape: f32[8,128], index: 2, kind: output, shape index: {}]
  %s3 = sld [smem:[#allocation0]]
  $region18: #{normalizing_flow_model_forward.1} parent=0
    _
  %s5 = ssub.s32 1, %s3
  %s6 = scalar_select 0, %s5, %s3
  // Predicated region
  $region2: #{normalizing_flow_model_forward.1} parent=0 // pred_check
    _
  $region3: #{normalizing_flow_model_forward.1} parent=0 // pred_check_branch
    %8 = sbr.rel (0) target = $region5
  $region4: #{normalizing_flow_model_forward.1} parent=0 // pred_region
    _
  $region5: #{normalizing_flow_model_forward.1} parent=0 // pred_fallthru
    _
  // Predicated region
  $region6: #{normalizing_flow_model_forward.1} parent=0 // pred_check
    _
  $region7: #{normalizing_flow_model_forward.1} parent=0 // pred_check_branch
    %10 = sbr.rel (0) target = $region9
  $region8: #{normalizing_flow_model_forward.1} parent=0 // pred_region
    _
  $region9: #{normalizing_flow_model_forward.1} parent=0 // pred_fallthru
    _
  %v11 = vld [vmem:[%s0] sm:$0xff]
  %v12 = vld [vmem:[%s1] sm:$0xff]
  %v13 = vld [vmem:[%s1 + $0x8] sm:$0xff]
  %v14 = vld [vmem:[%s1 + $0x10] sm:$0xff]
  %v15 = vld [vmem:[%s1 + $0x18] sm:$0xff]
  %v16 = vld [vmem:[%s1 + $0x20] sm:$0xff]
  %v17 = vld [vmem:[%s1 + $0x28] sm:$0xff]
  %v18 = vld [vmem:[%s1 + $0x30] sm:$0xff]
  %v19 = vld [vmem:[%s1 + $0x38] sm:$0xff]
  %v20 = vld [vmem:[%s1 + $0x40] sm:$0xff]
  %v21 = vld [vmem:[%s1 + $0x48] sm:$0xff]
  %v22 = vld [vmem:[%s1 + $0x50] sm:$0xff]
  %v23 = vld [vmem:[%s1 + $0x58] sm:$0xff]
  %v24 = vld [vmem:[%s1 + $0x60] sm:$0xff]
  %v25 = vld [vmem:[%s1 + $0x68] sm:$0xff]
  %v26 = vld [vmem:[%s1 + $0x70] sm:$0xff]
  %v27 = vld [vmem:[%s1 + $0x78] sm:$0xff]
  %v28 = vld [vmem:[%s1 + $0x80] sm:$0xff]
  %v29 = vld [vmem:[%s1 + $0x88] sm:$0x1]
  %v30 = vld [vmem:[%s1 + $0x89] sm:$0x1]
  %v31 = vld [vmem:[%s1 + $0x8a] sm:$0x1]
  %33 = vset.pattern.permute.xlu0 0
  %34 = vperm.xlu0 %33, %v11
  %v35 = vpop.permute.xlu0 %34
  %v37 = vlaneseq
  %v38 = vshrl.u32 %v37, 7
  %v39 = vsub.s32 0, %v38
  %v40 = vrot.slane %v12, %v39
  %v41 = vmul.f32 %v35, %v40
  %42 = vset.pattern.permute.xlu0 1
  %43 = vperm.xlu0 %42, %v11
  %v44 = vpop.permute.xlu0 %43
  %v46 = vlaneseq
  %v47 = vshrl.u32 %v46, 7
  %v48 = vsub.s32 1, %v47
  %v49 = vrot.slane %v12, %v48
  %v50 = vmul.f32 %v44, %v49
  %51 = vset.pattern.permute.xlu0 2
  %52 = vperm.xlu0 %51, %v11
  %v53 = vpop.permute.xlu0 %52
  %v55 = vlaneseq
  %v56 = vshrl.u32 %v55, 7
  %v57 = vsub.s32 2, %v56
  %v58 = vrot.slane %v12, %v57
  %v59 = vmul.f32 %v53, %v58
  %60 = vset.pattern.permute.xlu0 3
  %61 = vperm.xlu0 %60, %v11
  %v62 = vpop.permute.xlu0 %61
  %v64 = vlaneseq
  %v65 = vshrl.u32 %v64, 7
  %v66 = vsub.s32 3, %v65
  %v67 = vrot.slane %v12, %v66
  %v68 = vmul.f32 %v62, %v67
  %69 = vset.pattern.permute.xlu0 4
  %70 = vperm.xlu0 %69, %v11
  %v71 = vpop.permute.xlu0 %70
  %v73 = vlaneseq
  %v74 = vshrl.u32 %v73, 7
  %v75 = vsub.s32 4, %v74
  %v76 = vrot.slane %v12, %v75
  %v77 = vmul.f32 %v71, %v76
  %78 = vset.pattern.permute.xlu0 5
  %79 = vperm.xlu0 %78, %v11
  %v80 = vpop.permute.xlu0 %79
  %v82 = vlaneseq
  %v83 = vshrl.u32 %v82, 7
  %v84 = vsub.s32 5, %v83
  %v85 = vrot.slane %v12, %v84
  %v86 = vmul.f32 %v80, %v85
  %87 = vset.pattern.permute.xlu0 6
  %88 = vperm.xlu0 %87, %v11
  %v89 = vpop.permute.xlu0 %88
  %v91 = vlaneseq
  %v92 = vshrl.u32 %v91, 7
  %v93 = vsub.s32 6, %v92
  %v94 = vrot.slane %v12, %v93
  %v95 = vmul.f32 %v89, %v94
  %96 = vset.pattern.permute.xlu0 7
  %97 = vperm.xlu0 %96, %v11
  %v98 = vpop.permute.xlu0 %97
  %v100 = vlaneseq
  %v101 = vshrl.u32 %v100, 7
  %v102 = vsub.s32 7, %v101
  %v103 = vrot.slane %v12, %v102
  %v104 = vmul.f32 %v98, %v103
  %v105 = vadd.f32 %v41, %v50
  %v106 = vadd.f32 %v59, %v68
  %v107 = vadd.f32 %v77, %v86
  %v108 = vadd.f32 %v95, %v104
  %v109 = vadd.f32 %v105, %v106
  %v110 = vadd.f32 %v107, %v108
  %v111 = vadd.f32 %v109, %v110
  %v112 = vlaneseq
  %v113 = vshrl.u32 %v112, 7
  %v114 = vsub.s32 0, %v113
  %v115 = vrot.slane %v29, %v114
  %v116 = vadd.f32 %v111, %v115
  %vm117 = vcmp.ge.f32.partialorder %v116, 0.0
  %v118 = vmul.f32 %v116, 0.2
  %v119 = vsel %vm117, %v116, %v118
  %v120 = vlaneseq
  %v121 = vshrl.u32 %v120, 7
  %v122 = vsub.s32 0, %v121
  %v123 = vrot.slane %v30, %v122
  %vm124 = vcmask 523264
  %v126 = vsel %vm124, %v119, 0
  %128 = vmatprep.subr.mxu0 0.0
  %129 = vmatpush1.msra.mxu0 %v13
  %130 = vmatprep.subr.mxu0 0.0
  %131 = vmatpush1.msra.mxu0 %v14
  %132 = vmatprep.subr.mxu0 0.0
  %133 = vmatpush1.msra.mxu0 %v15
  %134 = vmatprep.subr.mxu0 0.0
  %135 = vmatpush1.msra.mxu0 %v16
  %136 = vmatprep.subr.mxu0 0.0
  %137 = vmatpush1.msra.mxu0 %v17
  %138 = vmatprep.subr.mxu0 0.0
  %139 = vmatpush1.msra.mxu0 %v18
  %140 = vmatprep.subr.mxu0 0.0
  %141 = vmatpush1.msra.mxu0 %v19
  %142 = vmatprep.subr.mxu0 0.0
  %143 = vmatpush1.msra.mxu0 %v20
  %144 = vmatprep.subr.mxu0 0.0
  %145 = vmatpush1.msra.mxu0 0.0
  %146 = vmatprep.subr.mxu0 0.0
  %147 = vmatpush1.msra.mxu0 0.0
  %148 = vmatprep.subr.mxu0 0.0
  %149 = vmatpush1.msra.mxu0 0.0
  %150 = vmatprep.subr.mxu0 0.0
  %151 = vmatpush1.msra.mxu0 0.0
  %152 = vmatprep.subr.mxu0 0.0
  %153 = vmatpush1.msra.mxu0 0.0
  %154 = vmatprep.subr.mxu0 0.0
  %155 = vmatpush1.msra.mxu0 0.0
  %156 = vmatprep.subr.mxu0 0.0
  %157 = vmatpush1.msra.mxu0 0.0
  %158 = vmatprep.subr.mxu0 0.0
  %159 = vmatpush1.msra.mxu0 0.0
  %160 = vmatprep.subr.mxu0 0.0
  %161 = vmatpush1.msra.mxu0 0.0
  %162 = vmatprep.subr.mxu0 0.0
  %163 = vmatpush1.msra.mxu0 0.0
  %164 = vmatprep.subr.mxu0 0.0
  %165 = vmatpush1.msra.mxu0 0.0
  %166 = vmatprep.subr.mxu0 0.0
  %167 = vmatpush1.msra.mxu0 0.0
  %168 = vmatprep.subr.mxu0 0.0
  %169 = vmatpush1.msra.mxu0 0.0
  %170 = vmatprep.subr.mxu0 0.0
  %171 = vmatpush1.msra.mxu0 0.0
  %172 = vmatprep.subr.mxu0 0.0
  %173 = vmatpush1.msra.mxu0 0.0
  %174 = vmatprep.subr.mxu0 0.0
  %175 = vmatpush1.msra.mxu0 0.0
  %176 = vmatprep.subr.mxu0 0.0
  %177 = vmatpush1.msra.mxu0 0.0
  %178 = vmatprep.subr.mxu0 0.0
  %179 = vmatpush1.msra.mxu0 0.0
  %180 = vmatprep.subr.mxu0 0.0
  %181 = vmatpush1.msra.mxu0 0.0
  %182 = vmatprep.subr.mxu0 0.0
  %183 = vmatpush1.msra.mxu0 0.0
  %184 = vmatprep.subr.mxu0 0.0
  %185 = vmatpush1.msra.mxu0 0.0
  %186 = vmatprep.subr.mxu0 0.0
  %187 = vmatpush1.msra.mxu0 0.0
  %188 = vmatprep.subr.mxu0 0.0
  %189 = vmatpush1.msra.mxu0 0.0
  %190 = vmatprep.subr.mxu0 0.0
  %191 = vmatpush1.msra.mxu0 0.0
  %192 = vmatprep.mubr.f32.mxu0 0.0
  %193 = vmatmul.mubr.f32.gmra.mrb[0].mxu0 %v126
  %v194 = vpop.f32.mrb[0].mxu0
  %v195 = vadd.f32 %v123, %v194
  %v196 = vpop.f32.mrb[0].mxu0
  %197 = vdwg.mxu0
  %vm198 = vcmp.ge.f32.partialorder %v195, 0.0
  %v199 = vmul.f32 %v195, 0.2
  %v200 = vsel %vm198, %v195, %v199
  %v201 = vlaneseq
  %v202 = vshrl.u32 %v201, 7
  %v203 = vsub.s32 0, %v202
  %v204 = vrot.slane %v31, %v203
  %v206 = vsel %vm124, %v200, 0
  %208 = vmatprep.subr.mxu0 0.0
  %209 = vmatpush1.msra.mxu0 %v21
  %210 = vmatprep.subr.mxu0 0.0
  %211 = vmatpush1.msra.mxu0 %v22
  %212 = vmatprep.subr.mxu0 0.0
  %213 = vmatpush1.msra.mxu0 %v23
  %214 = vmatprep.subr.mxu0 0.0
  %215 = vmatpush1.msra.mxu0 %v24
  %216 = vmatprep.subr.mxu0 0.0
  %217 = vmatpush1.msra.mxu0 %v25
  %218 = vmatprep.subr.mxu0 0.0
  %219 = vmatpush1.msra.mxu0 %v26
  %220 = vmatprep.subr.mxu0 0.0
  %221 = vmatpush1.msra.mxu0 %v27
  %222 = vmatprep.subr.mxu0 0.0
  %223 = vmatpush1.msra.mxu0 %v28
  %224 = vmatprep.subr.mxu0 0.0
  %225 = vmatpush1.msra.mxu0 0.0
  %226 = vmatprep.subr.mxu0 0.0
  %227 = vmatpush1.msra.mxu0 0.0
  %228 = vmatprep.subr.mxu0 0.0
  %229 = vmatpush1.msra.mxu0 0.0
  %230 = vmatprep.subr.mxu0 0.0
  %231 = vmatpush1.msra.mxu0 0.0
  %232 = vmatprep.subr.mxu0 0.0
  %233 = vmatpush1.msra.mxu0 0.0
  %234 = vmatprep.subr.mxu0 0.0
  %235 = vmatpush1.msra.mxu0 0.0
  %236 = vmatprep.subr.mxu0 0.0
  %237 = vmatpush1.msra.mxu0 0.0
  %238 = vmatprep.subr.mxu0 0.0
  %239 = vmatpush1.msra.mxu0 0.0
  %240 = vmatprep.subr.mxu0 0.0
  %241 = vmatpush1.msra.mxu0 0.0
  %242 = vmatprep.subr.mxu0 0.0
  %243 = vmatpush1.msra.mxu0 0.0
  %244 = vmatprep.subr.mxu0 0.0
  %245 = vmatpush1.msra.mxu0 0.0
  %246 = vmatprep.subr.mxu0 0.0
  %247 = vmatpush1.msra.mxu0 0.0
  %248 = vmatprep.subr.mxu0 0.0
  %249 = vmatpush1.msra.mxu0 0.0
  %250 = vmatprep.subr.mxu0 0.0
  %251 = vmatpush1.msra.mxu0 0.0
  %252 = vmatprep.subr.mxu0 0.0
  %253 = vmatpush1.msra.mxu0 0.0
  %254 = vmatprep.subr.mxu0 0.0
  %255 = vmatpush1.msra.mxu0 0.0
  %256 = vmatprep.subr.mxu0 0.0
  %257 = vmatpush1.msra.mxu0 0.0
  %258 = vmatprep.subr.mxu0 0.0
  %259 = vmatpush1.msra.mxu0 0.0
  %260 = vmatprep.subr.mxu0 0.0
  %261 = vmatpush1.msra.mxu0 0.0
  %262 = vmatprep.subr.mxu0 0.0
  %263 = vmatpush1.msra.mxu0 0.0
  %264 = vmatprep.subr.mxu0 0.0
  %265 = vmatpush1.msra.mxu0 0.0
  %266 = vmatprep.subr.mxu0 0.0
  %267 = vmatpush1.msra.mxu0 0.0
  %268 = vmatprep.subr.mxu0 0.0
  %269 = vmatpush1.msra.mxu0 0.0
  %270 = vmatprep.subr.mxu0 0.0
  %271 = vmatpush1.msra.mxu0 0.0
  %272 = vmatprep.mubr.f32.mxu0 0.0
  %273 = vmatmul.mubr.f32.gmra.mrb[0].mxu0 %v206
  %v274 = vpop.f32.mrb[0].mxu0
  %v275 = vadd.f32 %v204, %v274
  %v276 = vpop.f32.mrb[0].mxu0
  %277 = vdwg.mxu0
  %v278 = vmul.f32 %v275, 1.442695
  %v279 = vpow.pop %v278
  %v280 = vmul.f32 %v279, %v11
  %282 = vrot.lane.b32.xlu0 %v275, 120
  %v283 = vpop.permute.xlu0 %282
  %v285 = vadd.f32 %v280, %v283
  %vm286 = vcmask 64512
  %v287 = vsel %vm286, %v275, 0.0
  %288 = vadd.xlane.f32.xlu0 %v287
  %v289 = vpop.xlane.xlu0 %288
  %v290 = vadd.f32 %v289, 0.0
  %v291 = vld [vmem:[%s1 + $0x90] sm:$0xff]
  %v292 = vld [vmem:[%s1 + $0x98] sm:$0xff]
  %v293 = vld [vmem:[%s1 + $0xa0] sm:$0xff]
  %v294 = vld [vmem:[%s1 + $0xa8] sm:$0xff]
  %v295 = vld [vmem:[%s1 + $0xb0] sm:$0xff]
  %v296 = vld [vmem:[%s1 + $0xb8] sm:$0xff]
  %v297 = vld [vmem:[%s1 + $0xc0] sm:$0xff]
  %v298 = vld [vmem:[%s1 + $0xc8] sm:$0xff]
  %v299 = vld [vmem:[%s1 + $0xd0] sm:$0xff]
  %v300 = vld [vmem:[%s1 + $0xd8] sm:$0xff]
  %v301 = vld [vmem:[%s1 + $0xe0] sm:$0xff]
  %v302 = vld [vmem:[%s1 + $0xe8] sm:$0xff]
  %v303 = vld [vmem:[%s1 + $0xf0] sm:$0xff]
  %v304 = vld [vmem:[%s1 + $0xf8] sm:$0xff]
  %v305 = vld [vmem:[%s1 + $0x100] sm:$0xff]
  %v306 = vld [vmem:[%s1 + $0x108] sm:$0xff]
  %v307 = vld [vmem:[%s1 + $0x110] sm:$0xff]
  %v308 = vld [vmem:[%s1 + $0x118] sm:$0x1]
  %v309 = vld [vmem:[%s1 + $0x119] sm:$0x1]
  %v310 = vld [vmem:[%s1 + $0x11a] sm:$0x1]
  %312 = vset.pattern.permute.xlu0 0
  %313 = vperm.xlu0 %312, %v285
  %v314 = vpop.permute.xlu0 %313
  %v316 = vlaneseq
  %v317 = vshrl.u32 %v316, 7
  %v318 = vsub.s32 0, %v317
  %v319 = vrot.slane %v291, %v318
  %v320 = vmul.f32 %v314, %v319
  %321 = vset.pattern.permute.xlu0 1
  %322 = vperm.xlu0 %321, %v285
  %v323 = vpop.permute.xlu0 %322
  %v325 = vlaneseq
  %v326 = vshrl.u32 %v325, 7
  %v327 = vsub.s32 1, %v326
  %v328 = vrot.slane %v291, %v327
  %v329 = vmul.f32 %v323, %v328
  %330 = vset.pattern.permute.xlu0 2
  %331 = vperm.xlu0 %330, %v285
  %v332 = vpop.permute.xlu0 %331
  %v334 = vlaneseq
  %v335 = vshrl.u32 %v334, 7
  %v336 = vsub.s32 2, %v335
  %v337 = vrot.slane %v291, %v336
  %v338 = vmul.f32 %v332, %v337
  %339 = vset.pattern.permute.xlu0 3
  %340 = vperm.xlu0 %339, %v285
  %v341 = vpop.permute.xlu0 %340
  %v343 = vlaneseq
  %v344 = vshrl.u32 %v343, 7
  %v345 = vsub.s32 3, %v344
  %v346 = vrot.slane %v291, %v345
  %v347 = vmul.f32 %v341, %v346
  %348 = vset.pattern.permute.xlu0 4
  %349 = vperm.xlu0 %348, %v285
  %v350 = vpop.permute.xlu0 %349
  %v352 = vlaneseq
  %v353 = vshrl.u32 %v352, 7
  %v354 = vsub.s32 4, %v353
  %v355 = vrot.slane %v291, %v354
  %v356 = vmul.f32 %v350, %v355
  %357 = vset.pattern.permute.xlu0 5
  %358 = vperm.xlu0 %357, %v285
  %v359 = vpop.permute.xlu0 %358
  %v361 = vlaneseq
  %v362 = vshrl.u32 %v361, 7
  %v363 = vsub.s32 5, %v362
  %v364 = vrot.slane %v291, %v363
  %v365 = vmul.f32 %v359, %v364
  %366 = vset.pattern.permute.xlu0 6
  %367 = vperm.xlu0 %366, %v285
  %v368 = vpop.permute.xlu0 %367
  %v370 = vlaneseq
  %v371 = vshrl.u32 %v370, 7
  %v372 = vsub.s32 6, %v371
  %v373 = vrot.slane %v291, %v372
  %v374 = vmul.f32 %v368, %v373
  %375 = vset.pattern.permute.xlu0 7
  %376 = vperm.xlu0 %375, %v285
  %v377 = vpop.permute.xlu0 %376
  %v379 = vlaneseq
  %v380 = vshrl.u32 %v379, 7
  %v381 = vsub.s32 7, %v380
  %v382 = vrot.slane %v291, %v381
  %v383 = vmul.f32 %v377, %v382
  %v384 = vadd.f32 %v320, %v329
  %v385 = vadd.f32 %v338, %v347
  %v386 = vadd.f32 %v356, %v365
  %v387 = vadd.f32 %v374, %v383
  %v388 = vadd.f32 %v384, %v385
  %v389 = vadd.f32 %v386, %v387
  %v390 = vadd.f32 %v388, %v389
  %v391 = vlaneseq
  %v392 = vshrl.u32 %v391, 7
  %v393 = vsub.s32 0, %v392
  %v394 = vrot.slane %v308, %v393
  %v395 = vadd.f32 %v390, %v394
  %vm396 = vcmp.ge.f32.partialorder %v395, 0.0
  %v397 = vmul.f32 %v395, 0.2
  %v398 = vsel %vm396, %v395, %v397
  %v399 = vlaneseq
  %v400 = vshrl.u32 %v399, 7
  %v401 = vsub.s32 0, %v400
  %v402 = vrot.slane %v309, %v401
  %v404 = vsel %vm124, %v398, 0
  %406 = vmatprep.subr.mxu0 0.0
  %407 = vmatpush1.msra.mxu0 %v292
  %408 = vmatprep.subr.mxu0 0.0
  %409 = vmatpush1.msra.mxu0 %v293
  %410 = vmatprep.subr.mxu0 0.0
  %411 = vmatpush1.msra.mxu0 %v294
  %412 = vmatprep.subr.mxu0 0.0
  %413 = vmatpush1.msra.mxu0 %v295
  %414 = vmatprep.subr.mxu0 0.0
  %415 = vmatpush1.msra.mxu0 %v296
  %416 = vmatprep.subr.mxu0 0.0
  %417 = vmatpush1.msra.mxu0 %v297
  %418 = vmatprep.subr.mxu0 0.0
  %419 = vmatpush1.msra.mxu0 %v298
  %420 = vmatprep.subr.mxu0 0.0
  %421 = vmatpush1.msra.mxu0 %v299
  %422 = vmatprep.subr.mxu0 0.0
  %423 = vmatpush1.msra.mxu0 0.0
  %424 = vmatprep.subr.mxu0 0.0
  %425 = vmatpush1.msra.mxu0 0.0
  %426 = vmatprep.subr.mxu0 0.0
  %427 = vmatpush1.msra.mxu0 0.0
  %428 = vmatprep.subr.mxu0 0.0
  %429 = vmatpush1.msra.mxu0 0.0
  %430 = vmatprep.subr.mxu0 0.0
  %431 = vmatpush1.msra.mxu0 0.0
  %432 = vmatprep.subr.mxu0 0.0
  %433 = vmatpush1.msra.mxu0 0.0
  %434 = vmatprep.subr.mxu0 0.0
  %435 = vmatpush1.msra.mxu0 0.0
  %436 = vmatprep.subr.mxu0 0.0
  %437 = vmatpush1.msra.mxu0 0.0
  %438 = vmatprep.subr.mxu0 0.0
  %439 = vmatpush1.msra.mxu0 0.0
  %440 = vmatprep.subr.mxu0 0.0
  %441 = vmatpush1.msra.mxu0 0.0
  %442 = vmatprep.subr.mxu0 0.0
  %443 = vmatpush1.msra.mxu0 0.0
  %444 = vmatprep.subr.mxu0 0.0
  %445 = vmatpush1.msra.mxu0 0.0
  %446 = vmatprep.subr.mxu0 0.0
  %447 = vmatpush1.msra.mxu0 0.0
  %448 = vmatprep.subr.mxu0 0.0
  %449 = vmatpush1.msra.mxu0 0.0
  %450 = vmatprep.subr.mxu0 0.0
  %451 = vmatpush1.msra.mxu0 0.0
  %452 = vmatprep.subr.mxu0 0.0
  %453 = vmatpush1.msra.mxu0 0.0
  %454 = vmatprep.subr.mxu0 0.0
  %455 = vmatpush1.msra.mxu0 0.0
  %456 = vmatprep.subr.mxu0 0.0
  %457 = vmatpush1.msra.mxu0 0.0
  %458 = vmatprep.subr.mxu0 0.0
  %459 = vmatpush1.msra.mxu0 0.0
  %460 = vmatprep.subr.mxu0 0.0
  %461 = vmatpush1.msra.mxu0 0.0
  %462 = vmatprep.subr.mxu0 0.0
  %463 = vmatpush1.msra.mxu0 0.0
  %464 = vmatprep.subr.mxu0 0.0
  %465 = vmatpush1.msra.mxu0 0.0
  %466 = vmatprep.subr.mxu0 0.0
  %467 = vmatpush1.msra.mxu0 0.0
  %468 = vmatprep.subr.mxu0 0.0
  %469 = vmatpush1.msra.mxu0 0.0
  %470 = vmatprep.mubr.f32.mxu0 0.0
  %471 = vmatmul.mubr.f32.gmra.mrb[0].mxu0 %v404
  %v472 = vpop.f32.mrb[0].mxu0
  %v473 = vadd.f32 %v402, %v472
  %v474 = vpop.f32.mrb[0].mxu0
  %475 = vdwg.mxu0
  %vm476 = vcmp.ge.f32.partialorder %v473, 0.0
  %v477 = vmul.f32 %v473, 0.2
  %v478 = vsel %vm476, %v473, %v477
  %v479 = vlaneseq
  %v480 = vshrl.u32 %v479, 7
  %v481 = vsub.s32 0, %v480
  %v482 = vrot.slane %v310, %v481
  %v484 = vsel %vm124, %v478, 0
  %486 = vmatprep.subr.mxu0 0.0
  %487 = vmatpush1.msra.mxu0 %v300
  %488 = vmatprep.subr.mxu0 0.0
  %489 = vmatpush1.msra.mxu0 %v301
  %490 = vmatprep.subr.mxu0 0.0
  %491 = vmatpush1.msra.mxu0 %v302
  %492 = vmatprep.subr.mxu0 0.0
  %493 = vmatpush1.msra.mxu0 %v303
  %494 = vmatprep.subr.mxu0 0.0
  %495 = vmatpush1.msra.mxu0 %v304
  %496 = vmatprep.subr.mxu0 0.0
  %497 = vmatpush1.msra.mxu0 %v305
  %498 = vmatprep.subr.mxu0 0.0
  %499 = vmatpush1.msra.mxu0 %v306
  %500 = vmatprep.subr.mxu0 0.0
  %501 = vmatpush1.msra.mxu0 %v307
  %502 = vmatprep.subr.mxu0 0.0
  %503 = vmatpush1.msra.mxu0 0.0
  %504 = vmatprep.subr.mxu0 0.0
  %505 = vmatpush1.msra.mxu0 0.0
  %506 = vmatprep.subr.mxu0 0.0
  %507 = vmatpush1.msra.mxu0 0.0
  %508 = vmatprep.subr.mxu0 0.0
  %509 = vmatpush1.msra.mxu0 0.0
  %510 = vmatprep.subr.mxu0 0.0
  %511 = vmatpush1.msra.mxu0 0.0
  %512 = vmatprep.subr.mxu0 0.0
  %513 = vmatpush1.msra.mxu0 0.0
  %514 = vmatprep.subr.mxu0 0.0
  %515 = vmatpush1.msra.mxu0 0.0
  %516 = vmatprep.subr.mxu0 0.0
  %517 = vmatpush1.msra.mxu0 0.0
  %518 = vmatprep.subr.mxu0 0.0
  %519 = vmatpush1.msra.mxu0 0.0
  %520 = vmatprep.subr.mxu0 0.0
  %521 = vmatpush1.msra.mxu0 0.0
  %522 = vmatprep.subr.mxu0 0.0
  %523 = vmatpush1.msra.mxu0 0.0
  %524 = vmatprep.subr.mxu0 0.0
  %525 = vmatpush1.msra.mxu0 0.0
  %526 = vmatprep.subr.mxu0 0.0
  %527 = vmatpush1.msra.mxu0 0.0
  %528 = vmatprep.subr.mxu0 0.0
  %529 = vmatpush1.msra.mxu0 0.0
  %530 = vmatprep.subr.mxu0 0.0
  %531 = vmatpush1.msra.mxu0 0.0
  %532 = vmatprep.subr.mxu0 0.0
  %533 = vmatpush1.msra.mxu0 0.0
  %534 = vmatprep.subr.mxu0 0.0
  %535 = vmatpush1.msra.mxu0 0.0
  %536 = vmatprep.subr.mxu0 0.0
  %537 = vmatpush1.msra.mxu0 0.0
  %538 = vmatprep.subr.mxu0 0.0
  %539 = vmatpush1.msra.mxu0 0.0
  %540 = vmatprep.subr.mxu0 0.0
  %541 = vmatpush1.msra.mxu0 0.0
  %542 = vmatprep.subr.mxu0 0.0
  %543 = vmatpush1.msra.mxu0 0.0
  %544 = vmatprep.subr.mxu0 0.0
  %545 = vmatpush1.msra.mxu0 0.0
  %546 = vmatprep.subr.mxu0 0.0
  %547 = vmatpush1.msra.mxu0 0.0
  %548 = vmatprep.subr.mxu0 0.0
  %549 = vmatpush1.msra.mxu0 0.0
  %550 = vmatprep.mubr.f32.mxu0 0.0
  %551 = vmatmul.mubr.f32.gmra.mrb[0].mxu0 %v484
  %v552 = vpop.f32.mrb[0].mxu0
  %v553 = vadd.f32 %v482, %v552
  %v554 = vpop.f32.mrb[0].mxu0
  %555 = vdwg.mxu0
  %v556 = vmul.f32 %v553, 1.442695
  %v557 = vpow.pop %v556
  %v558 = vmul.f32 %v557, %v285
  %560 = vrot.lane.b32.xlu0 %v553, 120
  %v561 = vpop.permute.xlu0 %560
  %v563 = vadd.f32 %v558, %v561
  %v564 = vsel %vm286, %v553, 0.0
  %565 = vadd.xlane.f32.xlu0 %v564
  %v566 = vpop.xlane.xlu0 %565
  %v567 = vadd.f32 %v290, %v566
  %v568 = vld [vmem:[%s1 + $0x120] sm:$0xff]
  %v569 = vld [vmem:[%s1 + $0x128] sm:$0xff]
  %v570 = vld [vmem:[%s1 + $0x130] sm:$0xff]
  %v571 = vld [vmem:[%s1 + $0x138] sm:$0xff]
  %v572 = vld [vmem:[%s1 + $0x140] sm:$0xff]
  %v573 = vld [vmem:[%s1 + $0x148] sm:$0xff]
  %v574 = vld [vmem:[%s1 + $0x150] sm:$0xff]
  %v575 = vld [vmem:[%s1 + $0x158] sm:$0xff]
  %v576 = vld [vmem:[%s1 + $0x160] sm:$0xff]
  %v577 = vld [vmem:[%s1 + $0x168] sm:$0xff]
  %v578 = vld [vmem:[%s1 + $0x170] sm:$0xff]
  %v579 = vld [vmem:[%s1 + $0x178] sm:$0xff]
  %v580 = vld [vmem:[%s1 + $0x180] sm:$0xff]
  %v581 = vld [vmem:[%s1 + $0x188] sm:$0xff]
  %v582 = vld [vmem:[%s1 + $0x190] sm:$0xff]
  %v583 = vld [vmem:[%s1 + $0x198] sm:$0xff]
  %v584 = vld [vmem:[%s1 + $0x1a0] sm:$0xff]
  %v585 = vld [vmem:[%s1 + $0x1a8] sm:$0x1]
  %v586 = vld [vmem:[%s1 + $0x1a9] sm:$0x1]
  %v587 = vld [vmem:[%s1 + $0x1aa] sm:$0x1]
  %589 = vset.pattern.permute.xlu0 0
  %590 = vperm.xlu0 %589, %v563
  %v591 = vpop.permute.xlu0 %590
  %v593 = vlaneseq
  %v594 = vshrl.u32 %v593, 7
  %v595 = vsub.s32 0, %v594
  %v596 = vrot.slane %v568, %v595
  %v597 = vmul.f32 %v591, %v596
  %598 = vset.pattern.permute.xlu0 1
  %599 = vperm.xlu0 %598, %v563
  %v600 = vpop.permute.xlu0 %599
  %v602 = vlaneseq
  %v603 = vshrl.u32 %v602, 7
  %v604 = vsub.s32 1, %v603
  %v605 = vrot.slane %v568, %v604
  %v606 = vmul.f32 %v600, %v605
  %607 = vset.pattern.permute.xlu0 2
  %608 = vperm.xlu0 %607, %v563
  %v609 = vpop.permute.xlu0 %608
  %v611 = vlaneseq
  %v612 = vshrl.u32 %v611, 7
  %v613 = vsub.s32 2, %v612
  %v614 = vrot.slane %v568, %v613
  %v615 = vmul.f32 %v609, %v614
  %616 = vset.pattern.permute.xlu0 3
  %617 = vperm.xlu0 %616, %v563
  %v618 = vpop.permute.xlu0 %617
  %v620 = vlaneseq
  %v621 = vshrl.u32 %v620, 7
  %v622 = vsub.s32 3, %v621
  %v623 = vrot.slane %v568, %v622
  %v624 = vmul.f32 %v618, %v623
  %625 = vset.pattern.permute.xlu0 4
  %626 = vperm.xlu0 %625, %v563
  %v627 = vpop.permute.xlu0 %626
  %v629 = vlaneseq
  %v630 = vshrl.u32 %v629, 7
  %v631 = vsub.s32 4, %v630
  %v632 = vrot.slane %v568, %v631
  %v633 = vmul.f32 %v627, %v632
  %634 = vset.pattern.permute.xlu0 5
  %635 = vperm.xlu0 %634, %v563
  %v636 = vpop.permute.xlu0 %635
  %v638 = vlaneseq
  %v639 = vshrl.u32 %v638, 7
  %v640 = vsub.s32 5, %v639
  %v641 = vrot.slane %v568, %v640
  %v642 = vmul.f32 %v636, %v641
  %643 = vset.pattern.permute.xlu0 6
  %644 = vperm.xlu0 %643, %v563
  %v645 = vpop.permute.xlu0 %644
  %v647 = vlaneseq
  %v648 = vshrl.u32 %v647, 7
  %v649 = vsub.s32 6, %v648
  %v650 = vrot.slane %v568, %v649
  %v651 = vmul.f32 %v645, %v650
  %652 = vset.pattern.permute.xlu0 7
  %653 = vperm.xlu0 %652, %v563
  %v654 = vpop.permute.xlu0 %653
  %v656 = vlaneseq
  %v657 = vshrl.u32 %v656, 7
  %v658 = vsub.s32 7, %v657
  %v659 = vrot.slane %v568, %v658
  %v660 = vmul.f32 %v654, %v659
  %v661 = vadd.f32 %v597, %v606
  %v662 = vadd.f32 %v615, %v624
  %v663 = vadd.f32 %v633, %v642
  %v664 = vadd.f32 %v651, %v660
  %v665 = vadd.f32 %v661, %v662
  %v666 = vadd.f32 %v663, %v664
  %v667 = vadd.f32 %v665, %v666
  %v668 = vlaneseq
  %v669 = vshrl.u32 %v668, 7
  %v670 = vsub.s32 0, %v669
  %v671 = vrot.slane %v585, %v670
  %v672 = vadd.f32 %v667, %v671
  %vm673 = vcmp.ge.f32.partialorder %v672, 0.0
  %v674 = vmul.f32 %v672, 0.2
  %v675 = vsel %vm673, %v672, %v674
  %v676 = vlaneseq
  %v677 = vshrl.u32 %v676, 7
  %v678 = vsub.s32 0, %v677
  %v679 = vrot.slane %v586, %v678
  %v681 = vsel %vm124, %v675, 0
  %683 = vmatprep.subr.mxu0 0.0
  %684 = vmatpush1.msra.mxu0 %v569
  %685 = vmatprep.subr.mxu0 0.0
  %686 = vmatpush1.msra.mxu0 %v570
  %687 = vmatprep.subr.mxu0 0.0
  %688 = vmatpush1.msra.mxu0 %v571
  %689 = vmatprep.subr.mxu0 0.0
  %690 = vmatpush1.msra.mxu0 %v572
  %691 = vmatprep.subr.mxu0 0.0
  %692 = vmatpush1.msra.mxu0 %v573
  %693 = vmatprep.subr.mxu0 0.0
  %694 = vmatpush1.msra.mxu0 %v574
  %695 = vmatprep.subr.mxu0 0.0
  %696 = vmatpush1.msra.mxu0 %v575
  %697 = vmatprep.subr.mxu0 0.0
  %698 = vmatpush1.msra.mxu0 %v576
  %699 = vmatprep.subr.mxu0 0.0
  %700 = vmatpush1.msra.mxu0 0.0
  %701 = vmatprep.subr.mxu0 0.0
  %702 = vmatpush1.msra.mxu0 0.0
  %703 = vmatprep.subr.mxu0 0.0
  %704 = vmatpush1.msra.mxu0 0.0
  %705 = vmatprep.subr.mxu0 0.0
  %706 = vmatpush1.msra.mxu0 0.0
  %707 = vmatprep.subr.mxu0 0.0
  %708 = vmatpush1.msra.mxu0 0.0
  %709 = vmatprep.subr.mxu0 0.0
  %710 = vmatpush1.msra.mxu0 0.0
  %711 = vmatprep.subr.mxu0 0.0
  %712 = vmatpush1.msra.mxu0 0.0
  %713 = vmatprep.subr.mxu0 0.0
  %714 = vmatpush1.msra.mxu0 0.0
  %715 = vmatprep.subr.mxu0 0.0
  %716 = vmatpush1.msra.mxu0 0.0
  %717 = vmatprep.subr.mxu0 0.0
  %718 = vmatpush1.msra.mxu0 0.0
  %719 = vmatprep.subr.mxu0 0.0
  %720 = vmatpush1.msra.mxu0 0.0
  %721 = vmatprep.subr.mxu0 0.0
  %722 = vmatpush1.msra.mxu0 0.0
  %723 = vmatprep.subr.mxu0 0.0
  %724 = vmatpush1.msra.mxu0 0.0
  %725 = vmatprep.subr.mxu0 0.0
  %726 = vmatpush1.msra.mxu0 0.0
  %727 = vmatprep.subr.mxu0 0.0
  %728 = vmatpush1.msra.mxu0 0.0
  %729 = vmatprep.subr.mxu0 0.0
  %730 = vmatpush1.msra.mxu0 0.0
  %731 = vmatprep.subr.mxu0 0.0
  %732 = vmatpush1.msra.mxu0 0.0
  %733 = vmatprep.subr.mxu0 0.0
  %734 = vmatpush1.msra.mxu0 0.0
  %735 = vmatprep.subr.mxu0 0.0
  %736 = vmatpush1.msra.mxu0 0.0
  %737 = vmatprep.subr.mxu0 0.0
  %738 = vmatpush1.msra.mxu0 0.0
  %739 = vmatprep.subr.mxu0 0.0
  %740 = vmatpush1.msra.mxu0 0.0
  %741 = vmatprep.subr.mxu0 0.0
  %742 = vmatpush1.msra.mxu0 0.0
  %743 = vmatprep.subr.mxu0 0.0
  %744 = vmatpush1.msra.mxu0 0.0
  %745 = vmatprep.subr.mxu0 0.0
  %746 = vmatpush1.msra.mxu0 0.0
  %747 = vmatprep.mubr.f32.mxu0 0.0
  %748 = vmatmul.mubr.f32.gmra.mrb[0].mxu0 %v681
  %v749 = vpop.f32.mrb[0].mxu0
  %v750 = vadd.f32 %v679, %v749
  %v751 = vpop.f32.mrb[0].mxu0
  %752 = vdwg.mxu0
  %vm753 = vcmp.ge.f32.partialorder %v750, 0.0
  %v754 = vmul.f32 %v750, 0.2
  %v755 = vsel %vm753, %v750, %v754
  %v756 = vlaneseq
  %v757 = vshrl.u32 %v756, 7
  %v758 = vsub.s32 0, %v757
  %v759 = vrot.slane %v587, %v758
  %v761 = vsel %vm124, %v755, 0
  %763 = vmatprep.subr.mxu0 0.0
  %764 = vmatpush1.msra.mxu0 %v577
  %765 = vmatprep.subr.mxu0 0.0
  %766 = vmatpush1.msra.mxu0 %v578
  %767 = vmatprep.subr.mxu0 0.0
  %768 = vmatpush1.msra.mxu0 %v579
  %769 = vmatprep.subr.mxu0 0.0
  %770 = vmatpush1.msra.mxu0 %v580
  %771 = vmatprep.subr.mxu0 0.0
  %772 = vmatpush1.msra.mxu0 %v581
  %773 = vmatprep.subr.mxu0 0.0
  %774 = vmatpush1.msra.mxu0 %v582
  %775 = vmatprep.subr.mxu0 0.0
  %776 = vmatpush1.msra.mxu0 %v583
  %777 = vmatprep.subr.mxu0 0.0
  %778 = vmatpush1.msra.mxu0 %v584
  %779 = vmatprep.subr.mxu0 0.0
  %780 = vmatpush1.msra.mxu0 0.0
  %781 = vmatprep.subr.mxu0 0.0
  %782 = vmatpush1.msra.mxu0 0.0
  %783 = vmatprep.subr.mxu0 0.0
  %784 = vmatpush1.msra.mxu0 0.0
  %785 = vmatprep.subr.mxu0 0.0
  %786 = vmatpush1.msra.mxu0 0.0
  %787 = vmatprep.subr.mxu0 0.0
  %788 = vmatpush1.msra.mxu0 0.0
  %789 = vmatprep.subr.mxu0 0.0
  %790 = vmatpush1.msra.mxu0 0.0
  %791 = vmatprep.subr.mxu0 0.0
  %792 = vmatpush1.msra.mxu0 0.0
  %793 = vmatprep.subr.mxu0 0.0
  %794 = vmatpush1.msra.mxu0 0.0
  %795 = vmatprep.subr.mxu0 0.0
  %796 = vmatpush1.msra.mxu0 0.0
  %797 = vmatprep.subr.mxu0 0.0
  %798 = vmatpush1.msra.mxu0 0.0
  %799 = vmatprep.subr.mxu0 0.0
  %800 = vmatpush1.msra.mxu0 0.0
  %801 = vmatprep.subr.mxu0 0.0
  %802 = vmatpush1.msra.mxu0 0.0
  %803 = vmatprep.subr.mxu0 0.0
  %804 = vmatpush1.msra.mxu0 0.0
  %805 = vmatprep.subr.mxu0 0.0
  %806 = vmatpush1.msra.mxu0 0.0
  %807 = vmatprep.subr.mxu0 0.0
  %808 = vmatpush1.msra.mxu0 0.0
  %809 = vmatprep.subr.mxu0 0.0
  %810 = vmatpush1.msra.mxu0 0.0
  %811 = vmatprep.subr.mxu0 0.0
  %812 = vmatpush1.msra.mxu0 0.0
  %813 = vmatprep.subr.mxu0 0.0
  %814 = vmatpush1.msra.mxu0 0.0
  %815 = vmatprep.subr.mxu0 0.0
  %816 = vmatpush1.msra.mxu0 0.0
  %817 = vmatprep.subr.mxu0 0.0
  %818 = vmatpush1.msra.mxu0 0.0
  %819 = vmatprep.subr.mxu0 0.0
  %820 = vmatpush1.msra.mxu0 0.0
  %821 = vmatprep.subr.mxu0 0.0
  %822 = vmatpush1.msra.mxu0 0.0
  %823 = vmatprep.subr.mxu0 0.0
  %824 = vmatpush1.msra.mxu0 0.0
  %825 = vmatprep.subr.mxu0 0.0
  %826 = vmatpush1.msra.mxu0 0.0
  %827 = vmatprep.mubr.f32.mxu0 0.0
  %828 = vmatmul.mubr.f32.gmra.mrb[0].mxu0 %v761
  %v829 = vpop.f32.mrb[0].mxu0
  %v830 = vadd.f32 %v759, %v829
  %v831 = vpop.f32.mrb[0].mxu0
  %832 = vdwg.mxu0
  %v833 = vmul.f32 %v830, 1.442695
  %v834 = vpow.pop %v833
  %v835 = vmul.f32 %v834, %v563
  %837 = vrot.lane.b32.xlu0 %v830, 120
  %v838 = vpop.permute.xlu0 %837
  %v840 = vadd.f32 %v835, %v838
  %v841 = vsel %vm286, %v830, 0.0
  %842 = vadd.xlane.f32.xlu0 %v841
  %v843 = vpop.xlane.xlu0 %842
  %v844 = vadd.f32 %v567, %v843
  %v845 = vld [vmem:[%s1 + $0x1b0] sm:$0xff]
  %v846 = vld [vmem:[%s1 + $0x1b8] sm:$0xff]
  %v847 = vld [vmem:[%s1 + $0x1c0] sm:$0xff]
  %v848 = vld [vmem:[%s1 + $0x1c8] sm:$0xff]
  %v849 = vld [vmem:[%s1 + $0x1d0] sm:$0xff]
  %v850 = vld [vmem:[%s1 + $0x1d8] sm:$0xff]
  %v851 = vld [vmem:[%s1 + $0x1e0] sm:$0xff]
  %v852 = vld [vmem:[%s1 + $0x1e8] sm:$0xff]
  %v853 = vld [vmem:[%s1 + $0x1f0] sm:$0xff]
  %v854 = vld [vmem:[%s1 + $0x1f8] sm:$0xff]
  %v855 = vld [vmem:[%s1 + $0x200] sm:$0xff]
  %v856 = vld [vmem:[%s1 + $0x208] sm:$0xff]
  %v857 = vld [vmem:[%s1 + $0x210] sm:$0xff]
  %v858 = vld [vmem:[%s1 + $0x218] sm:$0xff]
  %v859 = vld [vmem:[%s1 + $0x220] sm:$0xff]
  %v860 = vld [vmem:[%s1 + $0x228] sm:$0xff]
  %v861 = vld [vmem:[%s1 + $0x230] sm:$0xff]
  %v862 = vld [vmem:[%s1 + $0x238] sm:$0x1]
  %v863 = vld [vmem:[%s1 + $0x239] sm:$0x1]
  %v864 = vld [vmem:[%s1 + $0x23a] sm:$0x1]
  %866 = vset.pattern.permute.xlu0 0
  %867 = vperm.xlu0 %866, %v840
  %v868 = vpop.permute.xlu0 %867
  %v870 = vlaneseq
  %v871 = vshrl.u32 %v870, 7
  %v872 = vsub.s32 0, %v871
  %v873 = vrot.slane %v845, %v872
  %v874 = vmul.f32 %v868, %v873
  %875 = vset.pattern.permute.xlu0 1
  %876 = vperm.xlu0 %875, %v840
  %v877 = vpop.permute.xlu0 %876
  %v879 = vlaneseq
  %v880 = vshrl.u32 %v879, 7
  %v881 = vsub.s32 1, %v880
  %v882 = vrot.slane %v845, %v881
  %v883 = vmul.f32 %v877, %v882
  %884 = vset.pattern.permute.xlu0 2
  %885 = vperm.xlu0 %884, %v840
  %v886 = vpop.permute.xlu0 %885
  %v888 = vlaneseq
  %v889 = vshrl.u32 %v888, 7
  %v890 = vsub.s32 2, %v889
  %v891 = vrot.slane %v845, %v890
  %v892 = vmul.f32 %v886, %v891
  %893 = vset.pattern.permute.xlu0 3
  %894 = vperm.xlu0 %893, %v840
  %v895 = vpop.permute.xlu0 %894
  %v897 = vlaneseq
  %v898 = vshrl.u32 %v897, 7
  %v899 = vsub.s32 3, %v898
  %v900 = vrot.slane %v845, %v899
  %v901 = vmul.f32 %v895, %v900
  %902 = vset.pattern.permute.xlu0 4
  %903 = vperm.xlu0 %902, %v840
  %v904 = vpop.permute.xlu0 %903
  %v906 = vlaneseq
  %v907 = vshrl.u32 %v906, 7
  %v908 = vsub.s32 4, %v907
  %v909 = vrot.slane %v845, %v908
  %v910 = vmul.f32 %v904, %v909
  %911 = vset.pattern.permute.xlu0 5
  %912 = vperm.xlu0 %911, %v840
  %v913 = vpop.permute.xlu0 %912
  %v915 = vlaneseq
  %v916 = vshrl.u32 %v915, 7
  %v917 = vsub.s32 5, %v916
  %v918 = vrot.slane %v845, %v917
  %v919 = vmul.f32 %v913, %v918
  %920 = vset.pattern.permute.xlu0 6
  %921 = vperm.xlu0 %920, %v840
  %v922 = vpop.permute.xlu0 %921
  %v924 = vlaneseq
  %v925 = vshrl.u32 %v924, 7
  %v926 = vsub.s32 6, %v925
  %v927 = vrot.slane %v845, %v926
  %v928 = vmul.f32 %v922, %v927
  %929 = vset.pattern.permute.xlu0 7
  %930 = vperm.xlu0 %929, %v840
  %v931 = vpop.permute.xlu0 %930
  %v933 = vlaneseq
  %v934 = vshrl.u32 %v933, 7
  %v935 = vsub.s32 7, %v934
  %v936 = vrot.slane %v845, %v935
  %v937 = vmul.f32 %v931, %v936
  %v938 = vadd.f32 %v874, %v883
  %v939 = vadd.f32 %v892, %v901
  %v940 = vadd.f32 %v910, %v919
  %v941 = vadd.f32 %v928, %v937
  %v942 = vadd.f32 %v938, %v939
  %v943 = vadd.f32 %v940, %v941
  %v944 = vadd.f32 %v942, %v943
  %v945 = vlaneseq
  %v946 = vshrl.u32 %v945, 7
  %v947 = vsub.s32 0, %v946
  %v948 = vrot.slane %v862, %v947
  %v949 = vadd.f32 %v944, %v948
  %vm950 = vcmp.ge.f32.partialorder %v949, 0.0
  %v951 = vmul.f32 %v949, 0.2
  %v952 = vsel %vm950, %v949, %v951
  %v953 = vlaneseq
  %v954 = vshrl.u32 %v953, 7
  %v955 = vsub.s32 0, %v954
  %v956 = vrot.slane %v863, %v955
  %v958 = vsel %vm124, %v952, 0
  %960 = vmatprep.subr.mxu0 0.0
  %961 = vmatpush1.msra.mxu0 %v846
  %962 = vmatprep.subr.mxu0 0.0
  %963 = vmatpush1.msra.mxu0 %v847
  %964 = vmatprep.subr.mxu0 0.0
  %965 = vmatpush1.msra.mxu0 %v848
  %966 = vmatprep.subr.mxu0 0.0
  %967 = vmatpush1.msra.mxu0 %v849
  %968 = vmatprep.subr.mxu0 0.0
  %969 = vmatpush1.msra.mxu0 %v850
  %970 = vmatprep.subr.mxu0 0.0
  %971 = vmatpush1.msra.mxu0 %v851
  %972 = vmatprep.subr.mxu0 0.0
  %973 = vmatpush1.msra.mxu0 %v852
  %974 = vmatprep.subr.mxu0 0.0
  %975 = vmatpush1.msra.mxu0 %v853
  %976 = vmatprep.subr.mxu0 0.0
  %977 = vmatpush1.msra.mxu0 0.0
  %978 = vmatprep.subr.mxu0 0.0
  %979 = vmatpush1.msra.mxu0 0.0
  %980 = vmatprep.subr.mxu0 0.0
  %981 = vmatpush1.msra.mxu0 0.0
  %982 = vmatprep.subr.mxu0 0.0
  %983 = vmatpush1.msra.mxu0 0.0
  %984 = vmatprep.subr.mxu0 0.0
  %985 = vmatpush1.msra.mxu0 0.0
  %986 = vmatprep.subr.mxu0 0.0
  %987 = vmatpush1.msra.mxu0 0.0
  %988 = vmatprep.subr.mxu0 0.0
  %989 = vmatpush1.msra.mxu0 0.0
  %990 = vmatprep.subr.mxu0 0.0
  %991 = vmatpush1.msra.mxu0 0.0
  %992 = vmatprep.subr.mxu0 0.0
  %993 = vmatpush1.msra.mxu0 0.0
  %994 = vmatprep.subr.mxu0 0.0
  %995 = vmatpush1.msra.mxu0 0.0
  %996 = vmatprep.subr.mxu0 0.0
  %997 = vmatpush1.msra.mxu0 0.0
  %998 = vmatprep.subr.mxu0 0.0
  %999 = vmatpush1.msra.mxu0 0.0
  %1000 = vmatprep.subr.mxu0 0.0
  %1001 = vmatpush1.msra.mxu0 0.0
  %1002 = vmatprep.subr.mxu0 0.0
  %1003 = vmatpush1.msra.mxu0 0.0
  %1004 = vmatprep.subr.mxu0 0.0
  %1005 = vmatpush1.msra.mxu0 0.0
  %1006 = vmatprep.subr.mxu0 0.0
  %1007 = vmatpush1.msra.mxu0 0.0
  %1008 = vmatprep.subr.mxu0 0.0
  %1009 = vmatpush1.msra.mxu0 0.0
  %1010 = vmatprep.subr.mxu0 0.0
  %1011 = vmatpush1.msra.mxu0 0.0
  %1012 = vmatprep.subr.mxu0 0.0
  %1013 = vmatpush1.msra.mxu0 0.0
  %1014 = vmatprep.subr.mxu0 0.0
  %1015 = vmatpush1.msra.mxu0 0.0
  %1016 = vmatprep.subr.mxu0 0.0
  %1017 = vmatpush1.msra.mxu0 0.0
  %1018 = vmatprep.subr.mxu0 0.0
  %1019 = vmatpush1.msra.mxu0 0.0
  %1020 = vmatprep.subr.mxu0 0.0
  %1021 = vmatpush1.msra.mxu0 0.0
  %1022 = vmatprep.subr.mxu0 0.0
  %1023 = vmatpush1.msra.mxu0 0.0
  %1024 = vmatprep.mubr.f32.mxu0 0.0
  %1025 = vmatmul.mubr.f32.gmra.mrb[0].mxu0 %v958
  %v1026 = vpop.f32.mrb[0].mxu0
  %v1027 = vadd.f32 %v956, %v1026
  %v1028 = vpop.f32.mrb[0].mxu0
  %1029 = vdwg.mxu0
  %vm1030 = vcmp.ge.f32.partialorder %v1027, 0.0
  %v1031 = vmul.f32 %v1027, 0.2
  %v1032 = vsel %vm1030, %v1027, %v1031
  %v1033 = vlaneseq
  %v1034 = vshrl.u32 %v1033, 7
  %v1035 = vsub.s32 0, %v1034
  %v1036 = vrot.slane %v864, %v1035
  %v1038 = vsel %vm124, %v1032, 0
  %1040 = vmatprep.subr.mxu0 0.0
  %1041 = vmatpush1.msra.mxu0 %v854
  %1042 = vmatprep.subr.mxu0 0.0
  %1043 = vmatpush1.msra.mxu0 %v855
  %1044 = vmatprep.subr.mxu0 0.0
  %1045 = vmatpush1.msra.mxu0 %v856
  %1046 = vmatprep.subr.mxu0 0.0
  %1047 = vmatpush1.msra.mxu0 %v857
  %1048 = vmatprep.subr.mxu0 0.0
  %1049 = vmatpush1.msra.mxu0 %v858
  %1050 = vmatprep.subr.mxu0 0.0
  %1051 = vmatpush1.msra.mxu0 %v859
  %1052 = vmatprep.subr.mxu0 0.0
  %1053 = vmatpush1.msra.mxu0 %v860
  %1054 = vmatprep.subr.mxu0 0.0
  %1055 = vmatpush1.msra.mxu0 %v861
  %1056 = vmatprep.subr.mxu0 0.0
  %1057 = vmatpush1.msra.mxu0 0.0
  %1058 = vmatprep.subr.mxu0 0.0
  %1059 = vmatpush1.msra.mxu0 0.0
  %1060 = vmatprep.subr.mxu0 0.0
  %1061 = vmatpush1.msra.mxu0 0.0
  %1062 = vmatprep.subr.mxu0 0.0
  %1063 = vmatpush1.msra.mxu0 0.0
  %1064 = vmatprep.subr.mxu0 0.0
  %1065 = vmatpush1.msra.mxu0 0.0
  %1066 = vmatprep.subr.mxu0 0.0
  %1067 = vmatpush1.msra.mxu0 0.0
  %1068 = vmatprep.subr.mxu0 0.0
  %1069 = vmatpush1.msra.mxu0 0.0
  %1070 = vmatprep.subr.mxu0 0.0
  %1071 = vmatpush1.msra.mxu0 0.0
  %1072 = vmatprep.subr.mxu0 0.0
  %1073 = vmatpush1.msra.mxu0 0.0
  %1074 = vmatprep.subr.mxu0 0.0
  %1075 = vmatpush1.msra.mxu0 0.0
  %1076 = vmatprep.subr.mxu0 0.0
  %1077 = vmatpush1.msra.mxu0 0.0
  %1078 = vmatprep.subr.mxu0 0.0
  %1079 = vmatpush1.msra.mxu0 0.0
  %1080 = vmatprep.subr.mxu0 0.0
  %1081 = vmatpush1.msra.mxu0 0.0
  %1082 = vmatprep.subr.mxu0 0.0
  %1083 = vmatpush1.msra.mxu0 0.0
  %1084 = vmatprep.subr.mxu0 0.0
  %1085 = vmatpush1.msra.mxu0 0.0
  %1086 = vmatprep.subr.mxu0 0.0
  %1087 = vmatpush1.msra.mxu0 0.0
  %1088 = vmatprep.subr.mxu0 0.0
  %1089 = vmatpush1.msra.mxu0 0.0
  %1090 = vmatprep.subr.mxu0 0.0
  %1091 = vmatpush1.msra.mxu0 0.0
  %1092 = vmatprep.subr.mxu0 0.0
  %1093 = vmatpush1.msra.mxu0 0.0
  %1094 = vmatprep.subr.mxu0 0.0
  %1095 = vmatpush1.msra.mxu0 0.0
  %1096 = vmatprep.subr.mxu0 0.0
  %1097 = vmatpush1.msra.mxu0 0.0
  %1098 = vmatprep.subr.mxu0 0.0
  %1099 = vmatpush1.msra.mxu0 0.0
  %1100 = vmatprep.subr.mxu0 0.0
  %1101 = vmatpush1.msra.mxu0 0.0
  %1102 = vmatprep.subr.mxu0 0.0
  %1103 = vmatpush1.msra.mxu0 0.0
  %1104 = vmatprep.mubr.f32.mxu0 0.0
  %1105 = vmatmul.mubr.f32.gmra.mrb[0].mxu0 %v1038
  %v1106 = vpop.f32.mrb[0].mxu0
  %v1107 = vadd.f32 %v1036, %v1106
  %v1108 = vpop.f32.mrb[0].mxu0
  %1109 = vdwg.mxu0
  %v1110 = vmul.f32 %v1107, 1.442695
  %v1111 = vpow.pop %v1110
  %v1112 = vmul.f32 %v1111, %v840
  %1114 = vrot.lane.b32.xlu0 %v1107, 120
  %v1115 = vpop.permute.xlu0 %1114
  %v1117 = vadd.f32 %v1112, %v1115
  %v1118 = vsel %vm286, %v1107, 0.0
  %1119 = vadd.xlane.f32.xlu0 %v1118
  %v1120 = vpop.xlane.xlu0 %1119
  %v1121 = vadd.f32 %v844, %v1120
  %v1122 = vmul.f32 %v1117, %v1117
  %v1123 = vsel %vm286, %v1122, 0.0
  %1124 = vadd.xlane.f32.xlu0 %v1123
  %v1125 = vpop.xlane.xlu0 %1124
  %v1126 = vmul.f32 %v1125, -0.5
  %v1127 = vsub.f32 %v1126, 7.351508
  %1128 = vrot.lane.b32.xlu0 %v285, 8
  %v1129 = vpop.permute.xlu0 %1128
  %1131 = vrot.lane.b32.xlu0 %v563, 16
  %v1132 = vpop.permute.xlu0 %1131
  %1134 = vrot.lane.b32.xlu0 %v840, 24
  %v1135 = vpop.permute.xlu0 %1134
  %1138 = vrot.lane.b32.xlu0 %v1117, 32
  %v1139 = vpop.permute.xlu0 %1138
  %v1141 = vsel %vm286, %v11, %v1129
  %vm1142 = vcmask 130048
  %v1143 = vsel %vm1142, %v1141, %v1132
  %vm1144 = vcmask 195584
  %v1145 = vsel %vm1144, %v1143, %v1135
  %vm1146 = vcmask 261120
  %v1147 = vsel %vm1146, %v1145, %v1139
  %vm1148 = vcmask 326656
  %v1149 = vsel %vm1148, %v1147, %v1127
  %vm1150 = vcmask 334848
  %v1151 = vsel %vm1150, %v1149, %v1121
  %vm1152 = vcmask 343040
  %v1153 = vsel %vm1152, %v1151, 0.0
  %1154 = vst [vmem:[%s2] sm:$0xff] %v1153
  // Predicated region
  $region10: #{normalizing_flow_model_forward.1} parent=0 // pred_check
    _
  $region11: #{normalizing_flow_model_forward.1} parent=0 // pred_check_branch
    %1156 = sbr.rel (0) target = $region13
  $region12: #{normalizing_flow_model_forward.1} parent=0 // pred_region
    _
  $region13: #{normalizing_flow_model_forward.1} parent=0 // pred_fallthru
    _
  // Predicated region
  $region14: #{normalizing_flow_model_forward.1} parent=0 // pred_check
    _
  $region15: #{normalizing_flow_model_forward.1} parent=0 // pred_check_branch
    %1158 = sbr.rel (0) target = $region17
  $region16: #{normalizing_flow_model_forward.1} parent=0 // pred_region
    _
  $region17: #{normalizing_flow_model_forward.1} parent=0 // pred_fallthru
    _

</llo_original>
